<compile_context>
chip_gen: v7x
topology: tpu7x:2x2x1
jax: 0.10.0
libtpu: 0.0.40
codegen_flags: <defaults>
</compile_context>

<pallas_src>
import jax
import jax.numpy as jnp
from jax.experimental import pallas as pl
from jax.experimental.pallas import tpu as pltpu

HIDDEN_SIZE = 50
INPUT_SIZE = 2
OUTPUT_SIZE = 20

# vreg-aligned padded sizes (f32 vreg tile = 8 sublanes x 128 lanes).
H_PAD = 128   # per-gate width padded 50 -> 128 (lane aligned)
O_PAD = 128   # output width padded 20 -> 128 (lane-dense store)
B_SUB = 8     # f32 sublane count


def _lstm_linear_kernel(x_ref, w_ih_ref, w_hh_ref, b_ref, w_out_ref, b_out_ref,
                        out_ref):
    """One batch tile: input projection + LSTM recurrence + Linear.

    x_ref     : (T, Bt, I)   f32  time-major batch tile
    w_ih_ref  : (I, 4*Hp)    f32  gate-wise zero-padded, pre-transposed
    w_hh_ref  : (Hp, 4*Hp)   f32  gate-wise zero-padded, pre-transposed
    b_ref     : (1, 4*Hp)    f32  b_ih + b_hh, gate-wise zero-padded
    w_out_ref : (Hp, Op)     f32  zero-padded, pre-transposed
    b_out_ref : (1, Op)      f32  zero-padded
    out_ref   : (Bt, Op)     f32  lane-dense padded output tile
    """
    T, Bt, I = x_ref.shape
    Hp = w_hh_ref.shape[0]

    w_hh = w_hh_ref[...]
    bias = b_ref[...]

    def sig(v):
        # sigmoid via tanh: single EUP push instead of exp + reciprocal.
        return 0.5 * (jnp.tanh(0.5 * v) + 1.0)

    h = jnp.zeros((Bt, Hp), jnp.float32)
    c = jnp.zeros((Bt, Hp), jnp.float32)

    # T is small and static: full unroll gives the scheduler visibility across
    # the MXU/EUP dependence chain.
    # TODO(synk): for long sequences (T > ~16) switch to a rolled
    # lax.fori_loop(..., unroll=2 or 4) to bound code size / vreg live ranges.
    for t in range(T):
        x_t = x_ref[t]                                   # (Bt, I)
        # K=I rank-1 VPU FMAs replace the K=2 MXU matmul; bias folded in.
        x_proj = bias
        for k in range(I):
            x_proj = x_proj + x_t[:, k:k + 1] * w_ih_ref[k:k + 1, :]
        gates = x_proj + jnp.dot(h, w_hh, preferred_element_type=jnp.float32)
        # Vreg-aligned 128-lane gate slices; PyTorch gate order [i, f, g, o].
        i_g = sig(gates[:, 0:Hp])
        f_g = sig(gates[:, Hp:2 * Hp])
        g_g = jnp.tanh(gates[:, 2 * Hp:3 * Hp])
        o_g = sig(gates[:, 3 * Hp:4 * Hp])
        c = f_g * c + i_g * g_g
        h = o_g * jnp.tanh(c)

    # Lane-dense (Bt, Op) unmasked store; real (B, O) sliced in the wrapper.
    out_ref[...] = (
        jnp.dot(h, w_out_ref[...], preferred_element_type=jnp.float32)
        + b_out_ref[...]
    )


def path_feature_extractor(x, packed_params, out_size=OUTPUT_SIZE):
    """x: (B, T, I) batch_first, like the PyTorch module. Returns (B, out_size)."""
    w_ih_p, w_hh_p, b_p, w_out_p, b_out_p = packed_params
    B, T, I = x.shape
    Hp = w_hh_p.shape[0]
    Op = w_out_p.shape[1]

    # Batch tile: sublane-aligned; capped so the per-tile footprint is
    # generation-independent (well under v5e's 16 MiB scoped VMEM default).
    if B <= 64:
        b_tile = ((B + B_SUB - 1) // B_SUB) * B_SUB
    else:
        b_tile = 64
    Bp = ((B + b_tile - 1) // b_tile) * b_tile
    nb = Bp // b_tile

    # Time-major, zero-pad batch to a tile multiple: (T, Bp, I).
    x_tm = jnp.transpose(x, (1, 0, 2)).astype(jnp.float32)
    x_tm = jnp.pad(x_tm, ((0, 0), (0, Bp - B), (0, 0)))

    out_padded = pl.pallas_call(
        _lstm_linear_kernel,
        out_shape=jax.ShapeDtypeStruct((Bp, Op), jnp.float32),
        grid=(nb,),
        in_specs=[
            pl.BlockSpec((T, b_tile, I), lambda b: (0, b, 0)),
            pl.BlockSpec((I, 4 * Hp), lambda b: (0, 0)),
            pl.BlockSpec((Hp, 4 * Hp), lambda b: (0, 0)),
            pl.BlockSpec((1, 4 * Hp), lambda b: (0, 0)),
            pl.BlockSpec((Hp, Op), lambda b: (0, 0)),
            pl.BlockSpec((1, Op), lambda b: (0, 0)),
        ],
        out_specs=pl.BlockSpec((b_tile, Op), lambda b: (b, 0)),
        compiler_params=pltpu.CompilerParams(
            dimension_semantics=("parallel",)),
    )(x_tm, w_ih_p, w_hh_p, b_p, w_out_p, b_out_p)
    return out_padded[:B, :out_size]


def init_params(key, input_size, hidden_size, output_size):
    """PyTorch-shaped raw params (uniform(-1/sqrt(H), 1/sqrt(H)), like nn.LSTM/Linear)."""
    k = 1.0 / jnp.sqrt(jnp.float32(hidden_size))
    ks = jax.random.split(key, 6)
    w_ih = jax.random.uniform(ks[0], (4 * hidden_size, input_size), jnp.float32, -k, k)
    w_hh = jax.random.uniform(ks[1], (4 * hidden_size, hidden_size), jnp.float32, -k, k)
    b_ih = jax.random.uniform(ks[2], (4 * hidden_size,), jnp.float32, -k, k)
    b_hh = jax.random.uniform(ks[3], (4 * hidden_size,), jnp.float32, -k, k)
    w_lin = jax.random.uniform(ks[4], (output_size, hidden_size), jnp.float32, -k, k)
    b_lin = jax.random.uniform(ks[5], (output_size,), jnp.float32, -k, k)
    return (w_ih, w_hh, b_ih, b_hh, w_lin, b_lin)


def pack_params(raw, h_pad=H_PAD, o_pad=O_PAD):
    """Pre-transpose and zero-pad each gate block to a 128-lane boundary.

    Zero padding keeps padded h/c columns exactly zero through the recurrence
    (padded gate pre-activations are 0 -> g=0, so c stays 0 and h stays 0) and
    cannot leak into the final Linear (padded w_out rows are 0).
    """
    w_ih, w_hh, b_ih, b_hh, w_lin, b_lin = raw
    four_h, I = w_ih.shape
    H = four_h // 4
    O = w_lin.shape[0]
    b = b_ih + b_hh

    w_ih_p = jnp.zeros((I, 4 * h_pad), jnp.float32)
    w_hh_p = jnp.zeros((h_pad, 4 * h_pad), jnp.float32)
    b_p = jnp.zeros((1, 4 * h_pad), jnp.float32)
    for g in range(4):
        src = slice(g * H, (g + 1) * H)
        dst = slice(g * h_pad, g * h_pad + H)
        w_ih_p = w_ih_p.at[:, dst].set(w_ih[src, :].T)
        w_hh_p = w_hh_p.at[:H, dst].set(w_hh[src, :].T)
        b_p = b_p.at[0, dst].set(b[src])

    w_out_p = jnp.zeros((h_pad, o_pad), jnp.float32).at[:H, :O].set(w_lin.T)
    b_out_p = jnp.zeros((1, o_pad), jnp.float32).at[0, :O].set(b_lin)
    return (w_ih_p, w_hh_p, b_p, w_out_p, b_out_p)


def reference_forward(x, raw):
    """Pure-JAX reference with PyTorch LSTM+Linear semantics (unpadded)."""
    w_ih, w_hh, b_ih, b_hh, w_lin, b_lin = raw
    B, T, _ = x.shape
    H = w_hh.shape[1]
    h = jnp.zeros((B, H), jnp.float32)
    c = jnp.zeros((B, H), jnp.float32)
    for t in range(T):
        gates = x[:, t, :] @ w_ih.T + h @ w_hh.T + b_ih + b_hh
        i_g = jax.nn.sigmoid(gates[:, 0:H])
        f_g = jax.nn.sigmoid(gates[:, H:2 * H])
        g_g = jnp.tanh(gates[:, 2 * H:3 * H])
        o_g = jax.nn.sigmoid(gates[:, 3 * H:4 * H])
        c = f_g * c + i_g * g_g
        h = o_g * jnp.tanh(c)
    return h @ w_lin.T + b_lin


if __name__ == "__main__":
    key = jax.random.PRNGKey(0)
    k_param, k_x = jax.random.split(key)

    B, T = 2, 8  # small batch / sequence length
    raw = init_params(k_param, INPUT_SIZE, HIDDEN_SIZE, OUTPUT_SIZE)
    packed = pack_params(raw)
    x = jax.random.normal(k_x, (B, T, INPUT_SIZE), jnp.float32)

    out = path_feature_extractor(x, packed)
    out = jax.block_until_ready(out)

    ref = reference_forward(x, raw)
    assert out.shape == (B, OUTPUT_SIZE), out.shape
    assert jnp.allclose(out, ref, atol=1e-4, rtol=1e-4), (
        f"max abs err {jnp.max(jnp.abs(out - ref))}"
    )

    print("KERNEL_OK")
</pallas_src>

<mosaic_0001>
module attributes {stable_mosaic.version = 11 : i64} {
  func.func @_lstm_linear_kernel(%arg0: i32, %arg1: memref<8x8x2xf32, #tpu.memory_space<vmem>>, %arg2: memref<2x512xf32, #tpu.memory_space<vmem>>, %arg3: memref<128x512xf32, #tpu.memory_space<vmem>>, %arg4: memref<1x512xf32, #tpu.memory_space<vmem>>, %arg5: memref<128x128xf32, #tpu.memory_space<vmem>>, %arg6: memref<1x128xf32, #tpu.memory_space<vmem>>, %arg7: memref<8x128xf32, #tpu.memory_space<vmem>>) attributes {dimension_semantics = [#tpu.dimension_semantics<parallel>], iteration_bounds = array<i64: 1>, scalar_prefetch = 0 : i64, scratch_operands = 0 : i64, tpu.core_type = #tpu.core_type<tc>, window_params = [{transform_indices = @transform_0, window_bounds = array<i64: 8, 8, 2>}, {pipeline_mode = #tpu.pipeline_mode<synchronous>, transform_indices = @transform_1, window_bounds = array<i64: 2, 512>}, {pipeline_mode = #tpu.pipeline_mode<synchronous>, transform_indices = @transform_2, window_bounds = array<i64: 128, 512>}, {pipeline_mode = #tpu.pipeline_mode<synchronous>, transform_indices = @transform_3, window_bounds = array<i64: 1, 512>}, {pipeline_mode = #tpu.pipeline_mode<synchronous>, transform_indices = @transform_4, window_bounds = array<i64: 128, 128>}, {pipeline_mode = #tpu.pipeline_mode<synchronous>, transform_indices = @transform_5, window_bounds = array<i64: 1, 128>}, {transform_indices = @transform_6, window_bounds = array<i64: 8, 128>}]} {
    %c0 = arith.constant 0 : index
    %c0_0 = arith.constant 0 : index
    %0 = vector.load %arg3[%c0, %c0_0] : memref<128x512xf32, #tpu.memory_space<vmem>>, vector<128x512xf32>
    %c0_1 = arith.constant 0 : index
    %c0_2 = arith.constant 0 : index
    %1 = vector.load %arg4[%c0_1, %c0_2] : memref<1x512xf32, #tpu.memory_space<vmem>>, vector<1x512xf32>
    %cst = arith.constant 0.000000e+00 : f32
    %2 = vector.broadcast %cst : f32 to vector<8x128xf32>
    %cst_3 = arith.constant 0.000000e+00 : f32
    %3 = vector.broadcast %cst_3 : f32 to vector<8x128xf32>
    %c0_4 = arith.constant 0 : index
    %c0_5 = arith.constant 0 : index
    %c0_6 = arith.constant 0 : index
    %4 = vector.load %arg1[%c0_4, %c0_5, %c0_6] : memref<8x8x2xf32, #tpu.memory_space<vmem>>, vector<1x8x2xf32>
    %5 = vector.shape_cast %4 : vector<1x8x2xf32> to vector<8x2xf32>
    %6 = vector.extract_strided_slice %5 {offsets = [0, 0], sizes = [8, 1], strides = [1, 1]} : vector<8x2xf32> to vector<8x1xf32>
    %c0_7 = arith.constant 0 : index
    %c0_8 = arith.constant 0 : index
    %7 = vector.load %arg2[%c0_7, %c0_8] : memref<2x512xf32, #tpu.memory_space<vmem>>, vector<1x512xf32>
    %8 = vector.broadcast %6 : vector<8x1xf32> to vector<8x512xf32>
    %9 = vector.broadcast %7 : vector<1x512xf32> to vector<8x512xf32>
    %10 = arith.mulf %8, %9 : vector<8x512xf32>
    %11 = vector.broadcast %1 : vector<1x512xf32> to vector<8x512xf32>
    %12 = arith.addf %11, %10 : vector<8x512xf32>
    %13 = vector.extract_strided_slice %5 {offsets = [0, 1], sizes = [8, 1], strides = [1, 1]} : vector<8x2xf32> to vector<8x1xf32>
    %c1 = arith.constant 1 : index
    %c0_9 = arith.constant 0 : index
    %14 = vector.load %arg2[%c1, %c0_9] : memref<2x512xf32, #tpu.memory_space<vmem>>, vector<1x512xf32>
    %15 = vector.broadcast %13 : vector<8x1xf32> to vector<8x512xf32>
    %16 = vector.broadcast %14 : vector<1x512xf32> to vector<8x512xf32>
    %17 = arith.mulf %15, %16 : vector<8x512xf32>
    %18 = arith.addf %12, %17 : vector<8x512xf32>
    %cst_10 = arith.constant dense<0.000000e+00> : vector<8x512xf32>
    %19 = tpu.matmul %2, %0, %cst_10 {dimension_numbers = #tpu.dot_dimension_numbers<[1], [0], [0], [1], [0, 0, 1, 1], [], []>} : vector<8x128xf32>, vector<128x512xf32>, vector<8x512xf32> -> vector<8x512xf32>
    %20 = arith.addf %18, %19 : vector<8x512xf32>
    %21 = vector.extract_strided_slice %20 {offsets = [0, 0], sizes = [8, 128], strides = [1, 1]} : vector<8x512xf32> to vector<8x128xf32>
    %cst_11 = arith.constant 5.000000e-01 : f32
    %22 = vector.broadcast %cst_11 : f32 to vector<8x128xf32>
    %23 = arith.mulf %22, %21 : vector<8x128xf32>
    %24 = math.tanh %23 : vector<8x128xf32>
    %cst_12 = arith.constant 1.000000e+00 : f32
    %25 = vector.broadcast %cst_12 : f32 to vector<8x128xf32>
    %26 = arith.addf %24, %25 : vector<8x128xf32>
    %cst_13 = arith.constant 5.000000e-01 : f32
    %27 = vector.broadcast %cst_13 : f32 to vector<8x128xf32>
    %28 = arith.mulf %27, %26 : vector<8x128xf32>
    %29 = vector.extract_strided_slice %20 {offsets = [0, 128], sizes = [8, 128], strides = [1, 1]} : vector<8x512xf32> to vector<8x128xf32>
    %cst_14 = arith.constant 5.000000e-01 : f32
    %30 = vector.broadcast %cst_14 : f32 to vector<8x128xf32>
    %31 = arith.mulf %30, %29 : vector<8x128xf32>
    %32 = math.tanh %31 : vector<8x128xf32>
    %cst_15 = arith.constant 1.000000e+00 : f32
    %33 = vector.broadcast %cst_15 : f32 to vector<8x128xf32>
    %34 = arith.addf %32, %33 : vector<8x128xf32>
    %cst_16 = arith.constant 5.000000e-01 : f32
    %35 = vector.broadcast %cst_16 : f32 to vector<8x128xf32>
    %36 = arith.mulf %35, %34 : vector<8x128xf32>
    %37 = vector.extract_strided_slice %20 {offsets = [0, 256], sizes = [8, 128], strides = [1, 1]} : vector<8x512xf32> to vector<8x128xf32>
    %38 = math.tanh %37 : vector<8x128xf32>
    %39 = vector.extract_strided_slice %20 {offsets = [0, 384], sizes = [8, 128], strides = [1, 1]} : vector<8x512xf32> to vector<8x128xf32>
    %cst_17 = arith.constant 5.000000e-01 : f32
    %40 = vector.broadcast %cst_17 : f32 to vector<8x128xf32>
    %41 = arith.mulf %40, %39 : vector<8x128xf32>
    %42 = math.tanh %41 : vector<8x128xf32>
    %cst_18 = arith.constant 1.000000e+00 : f32
    %43 = vector.broadcast %cst_18 : f32 to vector<8x128xf32>
    %44 = arith.addf %42, %43 : vector<8x128xf32>
    %cst_19 = arith.constant 5.000000e-01 : f32
    %45 = vector.broadcast %cst_19 : f32 to vector<8x128xf32>
    %46 = arith.mulf %45, %44 : vector<8x128xf32>
    %47 = arith.mulf %36, %3 : vector<8x128xf32>
    %48 = arith.mulf %28, %38 : vector<8x128xf32>
    %49 = arith.addf %47, %48 : vector<8x128xf32>
    %50 = math.tanh %49 : vector<8x128xf32>
    %51 = arith.mulf %46, %50 : vector<8x128xf32>
    %c1_20 = arith.constant 1 : index
    %c0_21 = arith.constant 0 : index
    %c0_22 = arith.constant 0 : index
    %52 = vector.load %arg1[%c1_20, %c0_21, %c0_22] : memref<8x8x2xf32, #tpu.memory_space<vmem>>, vector<1x8x2xf32>
    %53 = vector.shape_cast %52 : vector<1x8x2xf32> to vector<8x2xf32>
    %54 = vector.extract_strided_slice %53 {offsets = [0, 0], sizes = [8, 1], strides = [1, 1]} : vector<8x2xf32> to vector<8x1xf32>
    %c0_23 = arith.constant 0 : index
    %c0_24 = arith.constant 0 : index
    %55 = vector.load %arg2[%c0_23, %c0_24] : memref<2x512xf32, #tpu.memory_space<vmem>>, vector<1x512xf32>
    %56 = vector.broadcast %54 : vector<8x1xf32> to vector<8x512xf32>
    %57 = vector.broadcast %55 : vector<1x512xf32> to vector<8x512xf32>
    %58 = arith.mulf %56, %57 : vector<8x512xf32>
    %59 = vector.broadcast %1 : vector<1x512xf32> to vector<8x512xf32>
    %60 = arith.addf %59, %58 : vector<8x512xf32>
    %61 = vector.extract_strided_slice %53 {offsets = [0, 1], sizes = [8, 1], strides = [1, 1]} : vector<8x2xf32> to vector<8x1xf32>
    %c1_25 = arith.constant 1 : index
    %c0_26 = arith.constant 0 : index
    %62 = vector.load %arg2[%c1_25, %c0_26] : memref<2x512xf32, #tpu.memory_space<vmem>>, vector<1x512xf32>
    %63 = vector.broadcast %61 : vector<8x1xf32> to vector<8x512xf32>
    %64 = vector.broadcast %62 : vector<1x512xf32> to vector<8x512xf32>
    %65 = arith.mulf %63, %64 : vector<8x512xf32>
    %66 = arith.addf %60, %65 : vector<8x512xf32>
    %cst_27 = arith.constant dense<0.000000e+00> : vector<8x512xf32>
    %67 = tpu.matmul %51, %0, %cst_27 {dimension_numbers = #tpu.dot_dimension_numbers<[1], [0], [0], [1], [0, 0, 1, 1], [], []>} : vector<8x128xf32>, vector<128x512xf32>, vector<8x512xf32> -> vector<8x512xf32>
    %68 = arith.addf %66, %67 : vector<8x512xf32>
    %69 = vector.extract_strided_slice %68 {offsets = [0, 0], sizes = [8, 128], strides = [1, 1]} : vector<8x512xf32> to vector<8x128xf32>
    %cst_28 = arith.constant 5.000000e-01 : f32
    %70 = vector.broadcast %cst_28 : f32 to vector<8x128xf32>
    %71 = arith.mulf %70, %69 : vector<8x128xf32>
    %72 = math.tanh %71 : vector<8x128xf32>
    %cst_29 = arith.constant 1.000000e+00 : f32
    %73 = vector.broadcast %cst_29 : f32 to vector<8x128xf32>
    %74 = arith.addf %72, %73 : vector<8x128xf32>
    %cst_30 = arith.constant 5.000000e-01 : f32
    %75 = vector.broadcast %cst_30 : f32 to vector<8x128xf32>
    %76 = arith.mulf %75, %74 : vector<8x128xf32>
    %77 = vector.extract_strided_slice %68 {offsets = [0, 128], sizes = [8, 128], strides = [1, 1]} : vector<8x512xf32> to vector<8x128xf32>
    %cst_31 = arith.constant 5.000000e-01 : f32
    %78 = vector.broadcast %cst_31 : f32 to vector<8x128xf32>
    %79 = arith.mulf %78, %77 : vector<8x128xf32>
    %80 = math.tanh %79 : vector<8x128xf32>
    %cst_32 = arith.constant 1.000000e+00 : f32
    %81 = vector.broadcast %cst_32 : f32 to vector<8x128xf32>
    %82 = arith.addf %80, %81 : vector<8x128xf32>
    %cst_33 = arith.constant 5.000000e-01 : f32
    %83 = vector.broadcast %cst_33 : f32 to vector<8x128xf32>
    %84 = arith.mulf %83, %82 : vector<8x128xf32>
    %85 = vector.extract_strided_slice %68 {offsets = [0, 256], sizes = [8, 128], strides = [1, 1]} : vector<8x512xf32> to vector<8x128xf32>
    %86 = math.tanh %85 : vector<8x128xf32>
    %87 = vector.extract_strided_slice %68 {offsets = [0, 384], sizes = [8, 128], strides = [1, 1]} : vector<8x512xf32> to vector<8x128xf32>
    %cst_34 = arith.constant 5.000000e-01 : f32
    %88 = vector.broadcast %cst_34 : f32 to vector<8x128xf32>
    %89 = arith.mulf %88, %87 : vector<8x128xf32>
    %90 = math.tanh %89 : vector<8x128xf32>
    %cst_35 = arith.constant 1.000000e+00 : f32
    %91 = vector.broadcast %cst_35 : f32 to vector<8x128xf32>
    %92 = arith.addf %90, %91 : vector<8x128xf32>
    %cst_36 = arith.constant 5.000000e-01 : f32
    %93 = vector.broadcast %cst_36 : f32 to vector<8x128xf32>
    %94 = arith.mulf %93, %92 : vector<8x128xf32>
    %95 = arith.mulf %84, %49 : vector<8x128xf32>
    %96 = arith.mulf %76, %86 : vector<8x128xf32>
    %97 = arith.addf %95, %96 : vector<8x128xf32>
    %98 = math.tanh %97 : vector<8x128xf32>
    %99 = arith.mulf %94, %98 : vector<8x128xf32>
    %c2 = arith.constant 2 : index
    %c0_37 = arith.constant 0 : index
    %c0_38 = arith.constant 0 : index
    %100 = vector.load %arg1[%c2, %c0_37, %c0_38] : memref<8x8x2xf32, #tpu.memory_space<vmem>>, vector<1x8x2xf32>
    %101 = vector.shape_cast %100 : vector<1x8x2xf32> to vector<8x2xf32>
    %102 = vector.extract_strided_slice %101 {offsets = [0, 0], sizes = [8, 1], strides = [1, 1]} : vector<8x2xf32> to vector<8x1xf32>
    %c0_39 = arith.constant 0 : index
    %c0_40 = arith.constant 0 : index
    %103 = vector.load %arg2[%c0_39, %c0_40] : memref<2x512xf32, #tpu.memory_space<vmem>>, vector<1x512xf32>
    %104 = vector.broadcast %102 : vector<8x1xf32> to vector<8x512xf32>
    %105 = vector.broadcast %103 : vector<1x512xf32> to vector<8x512xf32>
    %106 = arith.mulf %104, %105 : vector<8x512xf32>
    %107 = vector.broadcast %1 : vector<1x512xf32> to vector<8x512xf32>
    %108 = arith.addf %107, %106 : vector<8x512xf32>
    %109 = vector.extract_strided_slice %101 {offsets = [0, 1], sizes = [8, 1], strides = [1, 1]} : vector<8x2xf32> to vector<8x1xf32>
    %c1_41 = arith.constant 1 : index
    %c0_42 = arith.constant 0 : index
    %110 = vector.load %arg2[%c1_41, %c0_42] : memref<2x512xf32, #tpu.memory_space<vmem>>, vector<1x512xf32>
    %111 = vector.broadcast %109 : vector<8x1xf32> to vector<8x512xf32>
    %112 = vector.broadcast %110 : vector<1x512xf32> to vector<8x512xf32>
    %113 = arith.mulf %111, %112 : vector<8x512xf32>
    %114 = arith.addf %108, %113 : vector<8x512xf32>
    %cst_43 = arith.constant dense<0.000000e+00> : vector<8x512xf32>
    %115 = tpu.matmul %99, %0, %cst_43 {dimension_numbers = #tpu.dot_dimension_numbers<[1], [0], [0], [1], [0, 0, 1, 1], [], []>} : vector<8x128xf32>, vector<128x512xf32>, vector<8x512xf32> -> vector<8x512xf32>
    %116 = arith.addf %114, %115 : vector<8x512xf32>
    %117 = vector.extract_strided_slice %116 {offsets = [0, 0], sizes = [8, 128], strides = [1, 1]} : vector<8x512xf32> to vector<8x128xf32>
    %cst_44 = arith.constant 5.000000e-01 : f32
    %118 = vector.broadcast %cst_44 : f32 to vector<8x128xf32>
    %119 = arith.mulf %118, %117 : vector<8x128xf32>
    %120 = math.tanh %119 : vector<8x128xf32>
    %cst_45 = arith.constant 1.000000e+00 : f32
    %121 = vector.broadcast %cst_45 : f32 to vector<8x128xf32>
    %122 = arith.addf %120, %121 : vector<8x128xf32>
    %cst_46 = arith.constant 5.000000e-01 : f32
    %123 = vector.broadcast %cst_46 : f32 to vector<8x128xf32>
    %124 = arith.mulf %123, %122 : vector<8x128xf32>
    %125 = vector.extract_strided_slice %116 {offsets = [0, 128], sizes = [8, 128], strides = [1, 1]} : vector<8x512xf32> to vector<8x128xf32>
    %cst_47 = arith.constant 5.000000e-01 : f32
    %126 = vector.broadcast %cst_47 : f32 to vector<8x128xf32>
    %127 = arith.mulf %126, %125 : vector<8x128xf32>
    %128 = math.tanh %127 : vector<8x128xf32>
    %cst_48 = arith.constant 1.000000e+00 : f32
    %129 = vector.broadcast %cst_48 : f32 to vector<8x128xf32>
    %130 = arith.addf %128, %129 : vector<8x128xf32>
    %cst_49 = arith.constant 5.000000e-01 : f32
    %131 = vector.broadcast %cst_49 : f32 to vector<8x128xf32>
    %132 = arith.mulf %131, %130 : vector<8x128xf32>
    %133 = vector.extract_strided_slice %116 {offsets = [0, 256], sizes = [8, 128], strides = [1, 1]} : vector<8x512xf32> to vector<8x128xf32>
    %134 = math.tanh %133 : vector<8x128xf32>
    %135 = vector.extract_strided_slice %116 {offsets = [0, 384], sizes = [8, 128], strides = [1, 1]} : vector<8x512xf32> to vector<8x128xf32>
    %cst_50 = arith.constant 5.000000e-01 : f32
    %136 = vector.broadcast %cst_50 : f32 to vector<8x128xf32>
    %137 = arith.mulf %136, %135 : vector<8x128xf32>
    %138 = math.tanh %137 : vector<8x128xf32>
    %cst_51 = arith.constant 1.000000e+00 : f32
    %139 = vector.broadcast %cst_51 : f32 to vector<8x128xf32>
    %140 = arith.addf %138, %139 : vector<8x128xf32>
    %cst_52 = arith.constant 5.000000e-01 : f32
    %141 = vector.broadcast %cst_52 : f32 to vector<8x128xf32>
    %142 = arith.mulf %141, %140 : vector<8x128xf32>
    %143 = arith.mulf %132, %97 : vector<8x128xf32>
    %144 = arith.mulf %124, %134 : vector<8x128xf32>
    %145 = arith.addf %143, %144 : vector<8x128xf32>
    %146 = math.tanh %145 : vector<8x128xf32>
    %147 = arith.mulf %142, %146 : vector<8x128xf32>
    %c3 = arith.constant 3 : index
    %c0_53 = arith.constant 0 : index
    %c0_54 = arith.constant 0 : index
    %148 = vector.load %arg1[%c3, %c0_53, %c0_54] : memref<8x8x2xf32, #tpu.memory_space<vmem>>, vector<1x8x2xf32>
    %149 = vector.shape_cast %148 : vector<1x8x2xf32> to vector<8x2xf32>
    %150 = vector.extract_strided_slice %149 {offsets = [0, 0], sizes = [8, 1], strides = [1, 1]} : vector<8x2xf32> to vector<8x1xf32>
    %c0_55 = arith.constant 0 : index
    %c0_56 = arith.constant 0 : index
    %151 = vector.load %arg2[%c0_55, %c0_56] : memref<2x512xf32, #tpu.memory_space<vmem>>, vector<1x512xf32>
    %152 = vector.broadcast %150 : vector<8x1xf32> to vector<8x512xf32>
    %153 = vector.broadcast %151 : vector<1x512xf32> to vector<8x512xf32>
    %154 = arith.mulf %152, %153 : vector<8x512xf32>
    %155 = vector.broadcast %1 : vector<1x512xf32> to vector<8x512xf32>
    %156 = arith.addf %155, %154 : vector<8x512xf32>
    %157 = vector.extract_strided_slice %149 {offsets = [0, 1], sizes = [8, 1], strides = [1, 1]} : vector<8x2xf32> to vector<8x1xf32>
    %c1_57 = arith.constant 1 : index
    %c0_58 = arith.constant 0 : index
    %158 = vector.load %arg2[%c1_57, %c0_58] : memref<2x512xf32, #tpu.memory_space<vmem>>, vector<1x512xf32>
    %159 = vector.broadcast %157 : vector<8x1xf32> to vector<8x512xf32>
    %160 = vector.broadcast %158 : vector<1x512xf32> to vector<8x512xf32>
    %161 = arith.mulf %159, %160 : vector<8x512xf32>
    %162 = arith.addf %156, %161 : vector<8x512xf32>
    %cst_59 = arith.constant dense<0.000000e+00> : vector<8x512xf32>
    %163 = tpu.matmul %147, %0, %cst_59 {dimension_numbers = #tpu.dot_dimension_numbers<[1], [0], [0], [1], [0, 0, 1, 1], [], []>} : vector<8x128xf32>, vector<128x512xf32>, vector<8x512xf32> -> vector<8x512xf32>
    %164 = arith.addf %162, %163 : vector<8x512xf32>
    %165 = vector.extract_strided_slice %164 {offsets = [0, 0], sizes = [8, 128], strides = [1, 1]} : vector<8x512xf32> to vector<8x128xf32>
    %cst_60 = arith.constant 5.000000e-01 : f32
    %166 = vector.broadcast %cst_60 : f32 to vector<8x128xf32>
    %167 = arith.mulf %166, %165 : vector<8x128xf32>
    %168 = math.tanh %167 : vector<8x128xf32>
    %cst_61 = arith.constant 1.000000e+00 : f32
    %169 = vector.broadcast %cst_61 : f32 to vector<8x128xf32>
    %170 = arith.addf %168, %169 : vector<8x128xf32>
    %cst_62 = arith.constant 5.000000e-01 : f32
    %171 = vector.broadcast %cst_62 : f32 to vector<8x128xf32>
    %172 = arith.mulf %171, %170 : vector<8x128xf32>
    %173 = vector.extract_strided_slice %164 {offsets = [0, 128], sizes = [8, 128], strides = [1, 1]} : vector<8x512xf32> to vector<8x128xf32>
    %cst_63 = arith.constant 5.000000e-01 : f32
    %174 = vector.broadcast %cst_63 : f32 to vector<8x128xf32>
    %175 = arith.mulf %174, %173 : vector<8x128xf32>
    %176 = math.tanh %175 : vector<8x128xf32>
    %cst_64 = arith.constant 1.000000e+00 : f32
    %177 = vector.broadcast %cst_64 : f32 to vector<8x128xf32>
    %178 = arith.addf %176, %177 : vector<8x128xf32>
    %cst_65 = arith.constant 5.000000e-01 : f32
    %179 = vector.broadcast %cst_65 : f32 to vector<8x128xf32>
    %180 = arith.mulf %179, %178 : vector<8x128xf32>
    %181 = vector.extract_strided_slice %164 {offsets = [0, 256], sizes = [8, 128], strides = [1, 1]} : vector<8x512xf32> to vector<8x128xf32>
    %182 = math.tanh %181 : vector<8x128xf32>
    %183 = vector.extract_strided_slice %164 {offsets = [0, 384], sizes = [8, 128], strides = [1, 1]} : vector<8x512xf32> to vector<8x128xf32>
    %cst_66 = arith.constant 5.000000e-01 : f32
    %184 = vector.broadcast %cst_66 : f32 to vector<8x128xf32>
    %185 = arith.mulf %184, %183 : vector<8x128xf32>
    %186 = math.tanh %185 : vector<8x128xf32>
    %cst_67 = arith.constant 1.000000e+00 : f32
    %187 = vector.broadcast %cst_67 : f32 to vector<8x128xf32>
    %188 = arith.addf %186, %187 : vector<8x128xf32>
    %cst_68 = arith.constant 5.000000e-01 : f32
    %189 = vector.broadcast %cst_68 : f32 to vector<8x128xf32>
    %190 = arith.mulf %189, %188 : vector<8x128xf32>
    %191 = arith.mulf %180, %145 : vector<8x128xf32>
    %192 = arith.mulf %172, %182 : vector<8x128xf32>
    %193 = arith.addf %191, %192 : vector<8x128xf32>
    %194 = math.tanh %193 : vector<8x128xf32>
    %195 = arith.mulf %190, %194 : vector<8x128xf32>
    %c4 = arith.constant 4 : index
    %c0_69 = arith.constant 0 : index
    %c0_70 = arith.constant 0 : index
    %196 = vector.load %arg1[%c4, %c0_69, %c0_70] : memref<8x8x2xf32, #tpu.memory_space<vmem>>, vector<1x8x2xf32>
    %197 = vector.shape_cast %196 : vector<1x8x2xf32> to vector<8x2xf32>
    %198 = vector.extract_strided_slice %197 {offsets = [0, 0], sizes = [8, 1], strides = [1, 1]} : vector<8x2xf32> to vector<8x1xf32>
    %c0_71 = arith.constant 0 : index
    %c0_72 = arith.constant 0 : index
    %199 = vector.load %arg2[%c0_71, %c0_72] : memref<2x512xf32, #tpu.memory_space<vmem>>, vector<1x512xf32>
    %200 = vector.broadcast %198 : vector<8x1xf32> to vector<8x512xf32>
    %201 = vector.broadcast %199 : vector<1x512xf32> to vector<8x512xf32>
    %202 = arith.mulf %200, %201 : vector<8x512xf32>
    %203 = vector.broadcast %1 : vector<1x512xf32> to vector<8x512xf32>
    %204 = arith.addf %203, %202 : vector<8x512xf32>
    %205 = vector.extract_strided_slice %197 {offsets = [0, 1], sizes = [8, 1], strides = [1, 1]} : vector<8x2xf32> to vector<8x1xf32>
    %c1_73 = arith.constant 1 : index
    %c0_74 = arith.constant 0 : index
    %206 = vector.load %arg2[%c1_73, %c0_74] : memref<2x512xf32, #tpu.memory_space<vmem>>, vector<1x512xf32>
    %207 = vector.broadcast %205 : vector<8x1xf32> to vector<8x512xf32>
    %208 = vector.broadcast %206 : vector<1x512xf32> to vector<8x512xf32>
    %209 = arith.mulf %207, %208 : vector<8x512xf32>
    %210 = arith.addf %204, %209 : vector<8x512xf32>
    %cst_75 = arith.constant dense<0.000000e+00> : vector<8x512xf32>
    %211 = tpu.matmul %195, %0, %cst_75 {dimension_numbers = #tpu.dot_dimension_numbers<[1], [0], [0], [1], [0, 0, 1, 1], [], []>} : vector<8x128xf32>, vector<128x512xf32>, vector<8x512xf32> -> vector<8x512xf32>
    %212 = arith.addf %210, %211 : vector<8x512xf32>
    %213 = vector.extract_strided_slice %212 {offsets = [0, 0], sizes = [8, 128], strides = [1, 1]} : vector<8x512xf32> to vector<8x128xf32>
    %cst_76 = arith.constant 5.000000e-01 : f32
    %214 = vector.broadcast %cst_76 : f32 to vector<8x128xf32>
    %215 = arith.mulf %214, %213 : vector<8x128xf32>
    %216 = math.tanh %215 : vector<8x128xf32>
    %cst_77 = arith.constant 1.000000e+00 : f32
    %217 = vector.broadcast %cst_77 : f32 to vector<8x128xf32>
    %218 = arith.addf %216, %217 : vector<8x128xf32>
    %cst_78 = arith.constant 5.000000e-01 : f32
    %219 = vector.broadcast %cst_78 : f32 to vector<8x128xf32>
    %220 = arith.mulf %219, %218 : vector<8x128xf32>
    %221 = vector.extract_strided_slice %212 {offsets = [0, 128], sizes = [8, 128], strides = [1, 1]} : vector<8x512xf32> to vector<8x128xf32>
    %cst_79 = arith.constant 5.000000e-01 : f32
    %222 = vector.broadcast %cst_79 : f32 to vector<8x128xf32>
    %223 = arith.mulf %222, %221 : vector<8x128xf32>
    %224 = math.tanh %223 : vector<8x128xf32>
    %cst_80 = arith.constant 1.000000e+00 : f32
    %225 = vector.broadcast %cst_80 : f32 to vector<8x128xf32>
    %226 = arith.addf %224, %225 : vector<8x128xf32>
    %cst_81 = arith.constant 5.000000e-01 : f32
    %227 = vector.broadcast %cst_81 : f32 to vector<8x128xf32>
    %228 = arith.mulf %227, %226 : vector<8x128xf32>
    %229 = vector.extract_strided_slice %212 {offsets = [0, 256], sizes = [8, 128], strides = [1, 1]} : vector<8x512xf32> to vector<8x128xf32>
    %230 = math.tanh %229 : vector<8x128xf32>
    %231 = vector.extract_strided_slice %212 {offsets = [0, 384], sizes = [8, 128], strides = [1, 1]} : vector<8x512xf32> to vector<8x128xf32>
    %cst_82 = arith.constant 5.000000e-01 : f32
    %232 = vector.broadcast %cst_82 : f32 to vector<8x128xf32>
    %233 = arith.mulf %232, %231 : vector<8x128xf32>
    %234 = math.tanh %233 : vector<8x128xf32>
    %cst_83 = arith.constant 1.000000e+00 : f32
    %235 = vector.broadcast %cst_83 : f32 to vector<8x128xf32>
    %236 = arith.addf %234, %235 : vector<8x128xf32>
    %cst_84 = arith.constant 5.000000e-01 : f32
    %237 = vector.broadcast %cst_84 : f32 to vector<8x128xf32>
    %238 = arith.mulf %237, %236 : vector<8x128xf32>
    %239 = arith.mulf %228, %193 : vector<8x128xf32>
    %240 = arith.mulf %220, %230 : vector<8x128xf32>
    %241 = arith.addf %239, %240 : vector<8x128xf32>
    %242 = math.tanh %241 : vector<8x128xf32>
    %243 = arith.mulf %238, %242 : vector<8x128xf32>
    %c5 = arith.constant 5 : index
    %c0_85 = arith.constant 0 : index
    %c0_86 = arith.constant 0 : index
    %244 = vector.load %arg1[%c5, %c0_85, %c0_86] : memref<8x8x2xf32, #tpu.memory_space<vmem>>, vector<1x8x2xf32>
    %245 = vector.shape_cast %244 : vector<1x8x2xf32> to vector<8x2xf32>
    %246 = vector.extract_strided_slice %245 {offsets = [0, 0], sizes = [8, 1], strides = [1, 1]} : vector<8x2xf32> to vector<8x1xf32>
    %c0_87 = arith.constant 0 : index
    %c0_88 = arith.constant 0 : index
    %247 = vector.load %arg2[%c0_87, %c0_88] : memref<2x512xf32, #tpu.memory_space<vmem>>, vector<1x512xf32>
    %248 = vector.broadcast %246 : vector<8x1xf32> to vector<8x512xf32>
    %249 = vector.broadcast %247 : vector<1x512xf32> to vector<8x512xf32>
    %250 = arith.mulf %248, %249 : vector<8x512xf32>
    %251 = vector.broadcast %1 : vector<1x512xf32> to vector<8x512xf32>
    %252 = arith.addf %251, %250 : vector<8x512xf32>
    %253 = vector.extract_strided_slice %245 {offsets = [0, 1], sizes = [8, 1], strides = [1, 1]} : vector<8x2xf32> to vector<8x1xf32>
    %c1_89 = arith.constant 1 : index
    %c0_90 = arith.constant 0 : index
    %254 = vector.load %arg2[%c1_89, %c0_90] : memref<2x512xf32, #tpu.memory_space<vmem>>, vector<1x512xf32>
    %255 = vector.broadcast %253 : vector<8x1xf32> to vector<8x512xf32>
    %256 = vector.broadcast %254 : vector<1x512xf32> to vector<8x512xf32>
    %257 = arith.mulf %255, %256 : vector<8x512xf32>
    %258 = arith.addf %252, %257 : vector<8x512xf32>
    %cst_91 = arith.constant dense<0.000000e+00> : vector<8x512xf32>
    %259 = tpu.matmul %243, %0, %cst_91 {dimension_numbers = #tpu.dot_dimension_numbers<[1], [0], [0], [1], [0, 0, 1, 1], [], []>} : vector<8x128xf32>, vector<128x512xf32>, vector<8x512xf32> -> vector<8x512xf32>
    %260 = arith.addf %258, %259 : vector<8x512xf32>
    %261 = vector.extract_strided_slice %260 {offsets = [0, 0], sizes = [8, 128], strides = [1, 1]} : vector<8x512xf32> to vector<8x128xf32>
    %cst_92 = arith.constant 5.000000e-01 : f32
    %262 = vector.broadcast %cst_92 : f32 to vector<8x128xf32>
    %263 = arith.mulf %262, %261 : vector<8x128xf32>
    %264 = math.tanh %263 : vector<8x128xf32>
    %cst_93 = arith.constant 1.000000e+00 : f32
    %265 = vector.broadcast %cst_93 : f32 to vector<8x128xf32>
    %266 = arith.addf %264, %265 : vector<8x128xf32>
    %cst_94 = arith.constant 5.000000e-01 : f32
    %267 = vector.broadcast %cst_94 : f32 to vector<8x128xf32>
    %268 = arith.mulf %267, %266 : vector<8x128xf32>
    %269 = vector.extract_strided_slice %260 {offsets = [0, 128], sizes = [8, 128], strides = [1, 1]} : vector<8x512xf32> to vector<8x128xf32>
    %cst_95 = arith.constant 5.000000e-01 : f32
    %270 = vector.broadcast %cst_95 : f32 to vector<8x128xf32>
    %271 = arith.mulf %270, %269 : vector<8x128xf32>
    %272 = math.tanh %271 : vector<8x128xf32>
    %cst_96 = arith.constant 1.000000e+00 : f32
    %273 = vector.broadcast %cst_96 : f32 to vector<8x128xf32>
    %274 = arith.addf %272, %273 : vector<8x128xf32>
    %cst_97 = arith.constant 5.000000e-01 : f32
    %275 = vector.broadcast %cst_97 : f32 to vector<8x128xf32>
    %276 = arith.mulf %275, %274 : vector<8x128xf32>
    %277 = vector.extract_strided_slice %260 {offsets = [0, 256], sizes = [8, 128], strides = [1, 1]} : vector<8x512xf32> to vector<8x128xf32>
    %278 = math.tanh %277 : vector<8x128xf32>
    %279 = vector.extract_strided_slice %260 {offsets = [0, 384], sizes = [8, 128], strides = [1, 1]} : vector<8x512xf32> to vector<8x128xf32>
    %cst_98 = arith.constant 5.000000e-01 : f32
    %280 = vector.broadcast %cst_98 : f32 to vector<8x128xf32>
    %281 = arith.mulf %280, %279 : vector<8x128xf32>
    %282 = math.tanh %281 : vector<8x128xf32>
    %cst_99 = arith.constant 1.000000e+00 : f32
    %283 = vector.broadcast %cst_99 : f32 to vector<8x128xf32>
    %284 = arith.addf %282, %283 : vector<8x128xf32>
    %cst_100 = arith.constant 5.000000e-01 : f32
    %285 = vector.broadcast %cst_100 : f32 to vector<8x128xf32>
    %286 = arith.mulf %285, %284 : vector<8x128xf32>
    %287 = arith.mulf %276, %241 : vector<8x128xf32>
    %288 = arith.mulf %268, %278 : vector<8x128xf32>
    %289 = arith.addf %287, %288 : vector<8x128xf32>
    %290 = math.tanh %289 : vector<8x128xf32>
    %291 = arith.mulf %286, %290 : vector<8x128xf32>
    %c6 = arith.constant 6 : index
    %c0_101 = arith.constant 0 : index
    %c0_102 = arith.constant 0 : index
    %292 = vector.load %arg1[%c6, %c0_101, %c0_102] : memref<8x8x2xf32, #tpu.memory_space<vmem>>, vector<1x8x2xf32>
    %293 = vector.shape_cast %292 : vector<1x8x2xf32> to vector<8x2xf32>
    %294 = vector.extract_strided_slice %293 {offsets = [0, 0], sizes = [8, 1], strides = [1, 1]} : vector<8x2xf32> to vector<8x1xf32>
    %c0_103 = arith.constant 0 : index
    %c0_104 = arith.constant 0 : index
    %295 = vector.load %arg2[%c0_103, %c0_104] : memref<2x512xf32, #tpu.memory_space<vmem>>, vector<1x512xf32>
    %296 = vector.broadcast %294 : vector<8x1xf32> to vector<8x512xf32>
    %297 = vector.broadcast %295 : vector<1x512xf32> to vector<8x512xf32>
    %298 = arith.mulf %296, %297 : vector<8x512xf32>
    %299 = vector.broadcast %1 : vector<1x512xf32> to vector<8x512xf32>
    %300 = arith.addf %299, %298 : vector<8x512xf32>
    %301 = vector.extract_strided_slice %293 {offsets = [0, 1], sizes = [8, 1], strides = [1, 1]} : vector<8x2xf32> to vector<8x1xf32>
    %c1_105 = arith.constant 1 : index
    %c0_106 = arith.constant 0 : index
    %302 = vector.load %arg2[%c1_105, %c0_106] : memref<2x512xf32, #tpu.memory_space<vmem>>, vector<1x512xf32>
    %303 = vector.broadcast %301 : vector<8x1xf32> to vector<8x512xf32>
    %304 = vector.broadcast %302 : vector<1x512xf32> to vector<8x512xf32>
    %305 = arith.mulf %303, %304 : vector<8x512xf32>
    %306 = arith.addf %300, %305 : vector<8x512xf32>
    %cst_107 = arith.constant dense<0.000000e+00> : vector<8x512xf32>
    %307 = tpu.matmul %291, %0, %cst_107 {dimension_numbers = #tpu.dot_dimension_numbers<[1], [0], [0], [1], [0, 0, 1, 1], [], []>} : vector<8x128xf32>, vector<128x512xf32>, vector<8x512xf32> -> vector<8x512xf32>
    %308 = arith.addf %306, %307 : vector<8x512xf32>
    %309 = vector.extract_strided_slice %308 {offsets = [0, 0], sizes = [8, 128], strides = [1, 1]} : vector<8x512xf32> to vector<8x128xf32>
    %cst_108 = arith.constant 5.000000e-01 : f32
    %310 = vector.broadcast %cst_108 : f32 to vector<8x128xf32>
    %311 = arith.mulf %310, %309 : vector<8x128xf32>
    %312 = math.tanh %311 : vector<8x128xf32>
    %cst_109 = arith.constant 1.000000e+00 : f32
    %313 = vector.broadcast %cst_109 : f32 to vector<8x128xf32>
    %314 = arith.addf %312, %313 : vector<8x128xf32>
    %cst_110 = arith.constant 5.000000e-01 : f32
    %315 = vector.broadcast %cst_110 : f32 to vector<8x128xf32>
    %316 = arith.mulf %315, %314 : vector<8x128xf32>
    %317 = vector.extract_strided_slice %308 {offsets = [0, 128], sizes = [8, 128], strides = [1, 1]} : vector<8x512xf32> to vector<8x128xf32>
    %cst_111 = arith.constant 5.000000e-01 : f32
    %318 = vector.broadcast %cst_111 : f32 to vector<8x128xf32>
    %319 = arith.mulf %318, %317 : vector<8x128xf32>
    %320 = math.tanh %319 : vector<8x128xf32>
    %cst_112 = arith.constant 1.000000e+00 : f32
    %321 = vector.broadcast %cst_112 : f32 to vector<8x128xf32>
    %322 = arith.addf %320, %321 : vector<8x128xf32>
    %cst_113 = arith.constant 5.000000e-01 : f32
    %323 = vector.broadcast %cst_113 : f32 to vector<8x128xf32>
    %324 = arith.mulf %323, %322 : vector<8x128xf32>
    %325 = vector.extract_strided_slice %308 {offsets = [0, 256], sizes = [8, 128], strides = [1, 1]} : vector<8x512xf32> to vector<8x128xf32>
    %326 = math.tanh %325 : vector<8x128xf32>
    %327 = vector.extract_strided_slice %308 {offsets = [0, 384], sizes = [8, 128], strides = [1, 1]} : vector<8x512xf32> to vector<8x128xf32>
    %cst_114 = arith.constant 5.000000e-01 : f32
    %328 = vector.broadcast %cst_114 : f32 to vector<8x128xf32>
    %329 = arith.mulf %328, %327 : vector<8x128xf32>
    %330 = math.tanh %329 : vector<8x128xf32>
    %cst_115 = arith.constant 1.000000e+00 : f32
    %331 = vector.broadcast %cst_115 : f32 to vector<8x128xf32>
    %332 = arith.addf %330, %331 : vector<8x128xf32>
    %cst_116 = arith.constant 5.000000e-01 : f32
    %333 = vector.broadcast %cst_116 : f32 to vector<8x128xf32>
    %334 = arith.mulf %333, %332 : vector<8x128xf32>
    %335 = arith.mulf %324, %289 : vector<8x128xf32>
    %336 = arith.mulf %316, %326 : vector<8x128xf32>
    %337 = arith.addf %335, %336 : vector<8x128xf32>
    %338 = math.tanh %337 : vector<8x128xf32>
    %339 = arith.mulf %334, %338 : vector<8x128xf32>
    %c7 = arith.constant 7 : index
    %c0_117 = arith.constant 0 : index
    %c0_118 = arith.constant 0 : index
    %340 = vector.load %arg1[%c7, %c0_117, %c0_118] : memref<8x8x2xf32, #tpu.memory_space<vmem>>, vector<1x8x2xf32>
    %341 = vector.shape_cast %340 : vector<1x8x2xf32> to vector<8x2xf32>
    %342 = vector.extract_strided_slice %341 {offsets = [0, 0], sizes = [8, 1], strides = [1, 1]} : vector<8x2xf32> to vector<8x1xf32>
    %c0_119 = arith.constant 0 : index
    %c0_120 = arith.constant 0 : index
    %343 = vector.load %arg2[%c0_119, %c0_120] : memref<2x512xf32, #tpu.memory_space<vmem>>, vector<1x512xf32>
    %344 = vector.broadcast %342 : vector<8x1xf32> to vector<8x512xf32>
    %345 = vector.broadcast %343 : vector<1x512xf32> to vector<8x512xf32>
    %346 = arith.mulf %344, %345 : vector<8x512xf32>
    %347 = vector.broadcast %1 : vector<1x512xf32> to vector<8x512xf32>
    %348 = arith.addf %347, %346 : vector<8x512xf32>
    %349 = vector.extract_strided_slice %341 {offsets = [0, 1], sizes = [8, 1], strides = [1, 1]} : vector<8x2xf32> to vector<8x1xf32>
    %c1_121 = arith.constant 1 : index
    %c0_122 = arith.constant 0 : index
    %350 = vector.load %arg2[%c1_121, %c0_122] : memref<2x512xf32, #tpu.memory_space<vmem>>, vector<1x512xf32>
    %351 = vector.broadcast %349 : vector<8x1xf32> to vector<8x512xf32>
    %352 = vector.broadcast %350 : vector<1x512xf32> to vector<8x512xf32>
    %353 = arith.mulf %351, %352 : vector<8x512xf32>
    %354 = arith.addf %348, %353 : vector<8x512xf32>
    %cst_123 = arith.constant dense<0.000000e+00> : vector<8x512xf32>
    %355 = tpu.matmul %339, %0, %cst_123 {dimension_numbers = #tpu.dot_dimension_numbers<[1], [0], [0], [1], [0, 0, 1, 1], [], []>} : vector<8x128xf32>, vector<128x512xf32>, vector<8x512xf32> -> vector<8x512xf32>
    %356 = arith.addf %354, %355 : vector<8x512xf32>
    %357 = vector.extract_strided_slice %356 {offsets = [0, 0], sizes = [8, 128], strides = [1, 1]} : vector<8x512xf32> to vector<8x128xf32>
    %cst_124 = arith.constant 5.000000e-01 : f32
    %358 = vector.broadcast %cst_124 : f32 to vector<8x128xf32>
    %359 = arith.mulf %358, %357 : vector<8x128xf32>
    %360 = math.tanh %359 : vector<8x128xf32>
    %cst_125 = arith.constant 1.000000e+00 : f32
    %361 = vector.broadcast %cst_125 : f32 to vector<8x128xf32>
    %362 = arith.addf %360, %361 : vector<8x128xf32>
    %cst_126 = arith.constant 5.000000e-01 : f32
    %363 = vector.broadcast %cst_126 : f32 to vector<8x128xf32>
    %364 = arith.mulf %363, %362 : vector<8x128xf32>
    %365 = vector.extract_strided_slice %356 {offsets = [0, 128], sizes = [8, 128], strides = [1, 1]} : vector<8x512xf32> to vector<8x128xf32>
    %cst_127 = arith.constant 5.000000e-01 : f32
    %366 = vector.broadcast %cst_127 : f32 to vector<8x128xf32>
    %367 = arith.mulf %366, %365 : vector<8x128xf32>
    %368 = math.tanh %367 : vector<8x128xf32>
    %cst_128 = arith.constant 1.000000e+00 : f32
    %369 = vector.broadcast %cst_128 : f32 to vector<8x128xf32>
    %370 = arith.addf %368, %369 : vector<8x128xf32>
    %cst_129 = arith.constant 5.000000e-01 : f32
    %371 = vector.broadcast %cst_129 : f32 to vector<8x128xf32>
    %372 = arith.mulf %371, %370 : vector<8x128xf32>
    %373 = vector.extract_strided_slice %356 {offsets = [0, 256], sizes = [8, 128], strides = [1, 1]} : vector<8x512xf32> to vector<8x128xf32>
    %374 = math.tanh %373 : vector<8x128xf32>
    %375 = vector.extract_strided_slice %356 {offsets = [0, 384], sizes = [8, 128], strides = [1, 1]} : vector<8x512xf32> to vector<8x128xf32>
    %cst_130 = arith.constant 5.000000e-01 : f32
    %376 = vector.broadcast %cst_130 : f32 to vector<8x128xf32>
    %377 = arith.mulf %376, %375 : vector<8x128xf32>
    %378 = math.tanh %377 : vector<8x128xf32>
    %cst_131 = arith.constant 1.000000e+00 : f32
    %379 = vector.broadcast %cst_131 : f32 to vector<8x128xf32>
    %380 = arith.addf %378, %379 : vector<8x128xf32>
    %cst_132 = arith.constant 5.000000e-01 : f32
    %381 = vector.broadcast %cst_132 : f32 to vector<8x128xf32>
    %382 = arith.mulf %381, %380 : vector<8x128xf32>
    %383 = arith.mulf %372, %337 : vector<8x128xf32>
    %384 = arith.mulf %364, %374 : vector<8x128xf32>
    %385 = arith.addf %383, %384 : vector<8x128xf32>
    %386 = math.tanh %385 : vector<8x128xf32>
    %387 = arith.mulf %382, %386 : vector<8x128xf32>
    %c0_133 = arith.constant 0 : index
    %c0_134 = arith.constant 0 : index
    %388 = vector.load %arg5[%c0_133, %c0_134] : memref<128x128xf32, #tpu.memory_space<vmem>>, vector<128x128xf32>
    %cst_135 = arith.constant dense<0.000000e+00> : vector<8x128xf32>
    %389 = tpu.matmul %387, %388, %cst_135 {dimension_numbers = #tpu.dot_dimension_numbers<[1], [0], [0], [1], [0, 0, 1, 1], [], []>} : vector<8x128xf32>, vector<128x128xf32>, vector<8x128xf32> -> vector<8x128xf32>
    %c0_136 = arith.constant 0 : index
    %c0_137 = arith.constant 0 : index
    %390 = vector.load %arg6[%c0_136, %c0_137] : memref<1x128xf32, #tpu.memory_space<vmem>>, vector<1x128xf32>
    %391 = vector.broadcast %390 : vector<1x128xf32> to vector<8x128xf32>
    %392 = arith.addf %389, %391 : vector<8x128xf32>
    %c0_138 = arith.constant 0 : index
    %c0_139 = arith.constant 0 : index
    %393 = vector.load %arg7[%c0_138, %c0_139] : memref<8x128xf32, #tpu.memory_space<vmem>>, vector<8x128xf32>
    tpu.vector_store %arg7[%c0_138, %c0_139], %392 {strides = array<i32>} : memref<8x128xf32, #tpu.memory_space<vmem>>, vector<8x128xf32>,
    return
  }
  func.func @transform_0(%arg0: i32) -> (i32, i32, i32) {
    %c0_i32 = arith.constant 0 : i32
    %c0_i32_0 = arith.constant 0 : i32
    %c0_i32_1 = arith.constant 0 : i32
    return %c0_i32, %arg0, %c0_i32_0 : i32, i32, i32
  }
  func.func @transform_1(%arg0: i32) -> (i32, i32) {
    %c0_i32 = arith.constant 0 : i32
    %c0_i32_0 = arith.constant 0 : i32
    %c0_i32_1 = arith.constant 0 : i32
    return %c0_i32, %c0_i32_0 : i32, i32
  }
  func.func @transform_2(%arg0: i32) -> (i32, i32) {
    %c0_i32 = arith.constant 0 : i32
    %c0_i32_0 = arith.constant 0 : i32
    %c0_i32_1 = arith.constant 0 : i32
    return %c0_i32, %c0_i32_0 : i32, i32
  }
  func.func @transform_3(%arg0: i32) -> (i32, i32) {
    %c0_i32 = arith.constant 0 : i32
    %c0_i32_0 = arith.constant 0 : i32
    %c0_i32_1 = arith.constant 0 : i32
    return %c0_i32, %c0_i32_0 : i32, i32
  }
  func.func @transform_4(%arg0: i32) -> (i32, i32) {
    %c0_i32 = arith.constant 0 : i32
    %c0_i32_0 = arith.constant 0 : i32
    %c0_i32_1 = arith.constant 0 : i32
    return %c0_i32, %c0_i32_0 : i32, i32
  }
  func.func @transform_5(%arg0: i32) -> (i32, i32) {
    %c0_i32 = arith.constant 0 : i32
    %c0_i32_0 = arith.constant 0 : i32
    %c0_i32_1 = arith.constant 0 : i32
    return %c0_i32, %c0_i32_0 : i32, i32
  }
  func.func @transform_6(%arg0: i32) -> (i32, i32) {
    %c0_i32 = arith.constant 0 : i32
    %c0_i32_0 = arith.constant 0 : i32
    return %arg0, %c0_i32 : i32, i32
  }
}

</mosaic_0001>

<llo_original>
// kernel: tpu_custom_call.1
$region0: #{tpu_custom_call.1}
  #allocation0 [shape = 'u32[]', space=smem, size = 0x4, offset = 0x4, fixed_abs, tag = 'smem constant byte address 0x4 - core index']
  #allocation1 [shape = 'u32[144,128]{1,0:T(1,128)}', space=vmem, size = 0x12000, scoped, tag = 'internal scratch']
  %s0 = inlined_call_operand.vmem [shape: f32[8,8,2], index: 0, kind: input, shape index: {}]
  %s1 = inlined_call_operand.vmem [shape: f32[2,512], index: 1, kind: input, shape index: {}]
  %s2 = inlined_call_operand.hbm [shape: f32[128,512], index: 2, kind: input, shape index: {}]
  %s3 = inlined_call_operand.vmem [shape: f32[1,512], index: 3, kind: input, shape index: {}]
  %s4 = inlined_call_operand.hbm [shape: f32[128,128], index: 4, kind: input, shape index: {}]
  %s5 = inlined_call_operand.vmem [shape: f32[1,128], index: 5, kind: input, shape index: {}]
  %s6 = inlined_call_operand.hbm [shape: f32[8,128], index: 6, kind: output, shape index: {}]
  %s7 = sld [smem:[#allocation0]]
  $region42: #{tpu_custom_call.1} parent=0
    _
  %s9 = ssub.s32 1, %s7
  %s10 = scalar_select 0, %s9, %s7
  $region1: #{tpu_custom_call.1} parent=0
    #allocation2 [shape = 'u8[262144]{0}', space=vmem, size = 0x40000, scoped, tag = 'input window, operand 2, single buffered']
    #allocation3 [shape = 's32[1]{0}', space=sflag, size = 0x4, scoped, tag = 'scoped memory for tpu_custom_call.1']
    #allocation4 [shape = 's32[1]{0}', space=sflag, size = 0x4, scoped, tag = 'scoped memory for tpu_custom_call.1']
    #allocation5 [shape = 'u8[65536]{0}', space=vmem, size = 0x10000, scoped, tag = 'input window, operand 4, single buffered']
    #allocation6 [shape = 's32[1]{0}', space=sflag, size = 0x4, scoped, tag = 'scoped memory for tpu_custom_call.1']
    #allocation7 [shape = 'u8[4096]{0}', space=vmem, size = 0x1000, scoped, tag = 'output window, operand 0, single buffered']
    %11 = vsyncpa [#allocation3], 0
    %12 = vsyncpa [#allocation6], 0
    %13 = vsyncpa [#allocation4], 0
    // Predicated region
    $region2: #{tpu_custom_call.1} parent=1 // pred_check
      _
    $region3: #{tpu_custom_call.1} parent=1 // pred_check_branch
      %15 = sbr.rel (0) target = $region5
    $region4: #{tpu_custom_call.1} parent=1 // pred_region
      _
    $region5: #{tpu_custom_call.1} parent=1 // pred_fallthru
      _
    // Predicated region
    $region6: #{tpu_custom_call.1} parent=1 // pred_check
      _
    $region7: #{tpu_custom_call.1} parent=1 // pred_check_branch
      %17 = sbr.rel (0) target = $region9
    $region8: #{tpu_custom_call.1} parent=1 // pred_region
      _
    $region9: #{tpu_custom_call.1} parent=1 // pred_fallthru
      _
    // Predicated region
    $region10: #{tpu_custom_call.1} parent=1 // pred_check
      _
    $region11: #{tpu_custom_call.1} parent=1 // pred_check_branch
      %19 = sbr.rel (0) target = $region13
    $region12: #{tpu_custom_call.1} parent=1 // pred_region
      %s21 = ssub.s32 8192, 8192
      %22 = vsyncadd [#allocation3], %s21
      %s23 = sshll.u32 [#allocation2], 4
      %s24 = int_to_ptr.vmem [resolvable:$true] %s23
      %29 = dma.hbm_to_vmem [thread:$0]  %s2, 8192, %s24, [#allocation3], 512, 512, 32
    $region13: #{tpu_custom_call.1} parent=1 // pred_fallthru
      _
    // Predicated region
    $region14: #{tpu_custom_call.1} parent=1 // pred_check
      _
    $region15: #{tpu_custom_call.1} parent=1 // pred_check_branch
      %31 = sbr.rel (0) target = $region17
    $region16: #{tpu_custom_call.1} parent=1 // pred_region
      _
    $region17: #{tpu_custom_call.1} parent=1 // pred_fallthru
      _
    // Predicated region
    $region18: #{tpu_custom_call.1} parent=1 // pred_check
      _
    $region19: #{tpu_custom_call.1} parent=1 // pred_check_branch
      %33 = sbr.rel (0) target = $region21
    $region20: #{tpu_custom_call.1} parent=1 // pred_region
      %s35 = ssub.s32 2048, 2048
      %36 = vsyncadd [#allocation6], %s35
      %s37 = sshll.u32 [#allocation5], 4
      %s38 = int_to_ptr.vmem [resolvable:$true] %s37
      %43 = dma.hbm_to_vmem [thread:$0]  %s4, 2048, %s38, [#allocation6], 128, 128, 8
    $region21: #{tpu_custom_call.1} parent=1 // pred_fallthru
      _
    // Predicated region
    $region22: #{tpu_custom_call.1} parent=1 // pred_check
      _
    $region23: #{tpu_custom_call.1} parent=1 // pred_check_branch
      %45 = sbr.rel (0) target = $region25
    $region24: #{tpu_custom_call.1} parent=1 // pred_region
      _
    $region25: #{tpu_custom_call.1} parent=1 // pred_fallthru
      _
    // Predicated region
    $region26: #{tpu_custom_call.1} parent=1 // pred_check
      _
    $region27: #{tpu_custom_call.1} parent=1 // pred_check_branch
      %47 = sbr.rel (0) target = $region29
    $region28: #{tpu_custom_call.1} parent=1 // pred_region
      %48 = dma.done [#allocation3], 8192
    $region29: #{tpu_custom_call.1} parent=1 // pred_fallthru
      _
    // Predicated region
    $region30: #{tpu_custom_call.1} parent=1 // pred_check
      _
    $region31: #{tpu_custom_call.1} parent=1 // pred_check_branch
      %50 = sbr.rel (0) target = $region33
    $region32: #{tpu_custom_call.1} parent=1 // pred_region
      %51 = dma.done [#allocation6], 2048
    $region33: #{tpu_custom_call.1} parent=1 // pred_fallthru
      _
    %v52 = vld [vmem:[#allocation2] sm:$0xff]
    %v53 = vld [vmem:[#allocation2 + $0x8] sm:$0xff]
    %v54 = vld [vmem:[#allocation2 + $0x10] sm:$0xff]
    %v55 = vld [vmem:[#allocation2 + $0x18] sm:$0xff]
    %v56 = vld [vmem:[#allocation2 + $0x20] sm:$0xff]
    %v57 = vld [vmem:[#allocation2 + $0x28] sm:$0xff]
    %v58 = vld [vmem:[#allocation2 + $0x30] sm:$0xff]
    %v59 = vld [vmem:[#allocation2 + $0x38] sm:$0xff]
    %v60 = vld [vmem:[#allocation2 + $0x40] sm:$0xff]
    %v61 = vld [vmem:[#allocation2 + $0x48] sm:$0xff]
    %v62 = vld [vmem:[#allocation2 + $0x50] sm:$0xff]
    %v63 = vld [vmem:[#allocation2 + $0x58] sm:$0xff]
    %v64 = vld [vmem:[#allocation2 + $0x60] sm:$0xff]
    %v65 = vld [vmem:[#allocation2 + $0x68] sm:$0xff]
    %v66 = vld [vmem:[#allocation2 + $0x70] sm:$0xff]
    %v67 = vld [vmem:[#allocation2 + $0x78] sm:$0xff]
    %v68 = vld [vmem:[#allocation2 + $0x80] sm:$0xff]
    %v69 = vld [vmem:[#allocation2 + $0x88] sm:$0xff]
    %v70 = vld [vmem:[#allocation2 + $0x90] sm:$0xff]
    %v71 = vld [vmem:[#allocation2 + $0x98] sm:$0xff]
    %v72 = vld [vmem:[#allocation2 + $0xa0] sm:$0xff]
    %v73 = vld [vmem:[#allocation2 + $0xa8] sm:$0xff]
    %v74 = vld [vmem:[#allocation2 + $0xb0] sm:$0xff]
    %v75 = vld [vmem:[#allocation2 + $0xb8] sm:$0xff]
    %v76 = vld [vmem:[#allocation2 + $0xc0] sm:$0xff]
    %v77 = vld [vmem:[#allocation2 + $0xc8] sm:$0xff]
    %v78 = vld [vmem:[#allocation2 + $0xd0] sm:$0xff]
    %v79 = vld [vmem:[#allocation2 + $0xd8] sm:$0xff]
    %v80 = vld [vmem:[#allocation2 + $0xe0] sm:$0xff]
    %v81 = vld [vmem:[#allocation2 + $0xe8] sm:$0xff]
    %v82 = vld [vmem:[#allocation2 + $0xf0] sm:$0xff]
    %v83 = vld [vmem:[#allocation2 + $0xf8] sm:$0xff]
    %v84 = vld [vmem:[#allocation2 + $0x100] sm:$0xff]
    %v85 = vld [vmem:[#allocation2 + $0x108] sm:$0xff]
    %v86 = vld [vmem:[#allocation2 + $0x110] sm:$0xff]
    %v87 = vld [vmem:[#allocation2 + $0x118] sm:$0xff]
    %v88 = vld [vmem:[#allocation2 + $0x120] sm:$0xff]
    %v89 = vld [vmem:[#allocation2 + $0x128] sm:$0xff]
    %v90 = vld [vmem:[#allocation2 + $0x130] sm:$0xff]
    %v91 = vld [vmem:[#allocation2 + $0x138] sm:$0xff]
    %v92 = vld [vmem:[#allocation2 + $0x140] sm:$0xff]
    %v93 = vld [vmem:[#allocation2 + $0x148] sm:$0xff]
    %v94 = vld [vmem:[#allocation2 + $0x150] sm:$0xff]
    %v95 = vld [vmem:[#allocation2 + $0x158] sm:$0xff]
    %v96 = vld [vmem:[#allocation2 + $0x160] sm:$0xff]
    %v97 = vld [vmem:[#allocation2 + $0x168] sm:$0xff]
    %v98 = vld [vmem:[#allocation2 + $0x170] sm:$0xff]
    %v99 = vld [vmem:[#allocation2 + $0x178] sm:$0xff]
    %v100 = vld [vmem:[#allocation2 + $0x180] sm:$0xff]
    %v101 = vld [vmem:[#allocation2 + $0x188] sm:$0xff]
    %v102 = vld [vmem:[#allocation2 + $0x190] sm:$0xff]
    %v103 = vld [vmem:[#allocation2 + $0x198] sm:$0xff]
    %v104 = vld [vmem:[#allocation2 + $0x1a0] sm:$0xff]
    %v105 = vld [vmem:[#allocation2 + $0x1a8] sm:$0xff]
    %v106 = vld [vmem:[#allocation2 + $0x1b0] sm:$0xff]
    %v107 = vld [vmem:[#allocation2 + $0x1b8] sm:$0xff]
    %v108 = vld [vmem:[#allocation2 + $0x1c0] sm:$0xff]
    %v109 = vld [vmem:[#allocation2 + $0x1c8] sm:$0xff]
    %v110 = vld [vmem:[#allocation2 + $0x1d0] sm:$0xff]
    %v111 = vld [vmem:[#allocation2 + $0x1d8] sm:$0xff]
    %v112 = vld [vmem:[#allocation2 + $0x1e0] sm:$0xff]
    %v113 = vld [vmem:[#allocation2 + $0x1e8] sm:$0xff]
    %v114 = vld [vmem:[#allocation2 + $0x1f0] sm:$0xff]
    %v115 = vld [vmem:[#allocation2 + $0x1f8] sm:$0xff]
    %v116 = vld [vmem:[%s3] sm:$0xf]
    %v117 = vld [vmem:[%s0] sm:$0xff]
    %v118 = vld [vmem:[%s1] ss:$2 sm:$0xf]
    %120 = vset.pattern.permute.xlu0 0
    %121 = vperm.xlu0 %120, %v117
    %v122 = vpop.permute.xlu0 %121
    %v125 = vlaneseq
    %v126 = vshrl.u32 %v125, 7
    %v127 = vsub.s32 0, %v126
    %v128 = vrot.slane %v118, %v127
    %v129 = vlaneseq
    %v130 = vshrl.u32 %v129, 7
    %v131 = vsub.s32 1, %v130
    %v132 = vrot.slane %v118, %v131
    %v133 = vlaneseq
    %v134 = vshrl.u32 %v133, 7
    %v135 = vsub.s32 2, %v134
    %v136 = vrot.slane %v118, %v135
    %v137 = vlaneseq
    %v138 = vshrl.u32 %v137, 7
    %v139 = vsub.s32 3, %v138
    %v140 = vrot.slane %v118, %v139
    %v145 = vmul.f32 %v122, %v128
    %v146 = vmul.f32 %v122, %v132
    %v147 = vmul.f32 %v122, %v136
    %v148 = vmul.f32 %v122, %v140
    %v150 = vlaneseq
    %v151 = vshrl.u32 %v150, 7
    %v152 = vsub.s32 0, %v151
    %v153 = vrot.slane %v116, %v152
    %v154 = vlaneseq
    %v155 = vshrl.u32 %v154, 7
    %v156 = vsub.s32 1, %v155
    %v157 = vrot.slane %v116, %v156
    %v158 = vlaneseq
    %v159 = vshrl.u32 %v158, 7
    %v160 = vsub.s32 2, %v159
    %v161 = vrot.slane %v116, %v160
    %v162 = vlaneseq
    %v163 = vshrl.u32 %v162, 7
    %v164 = vsub.s32 3, %v163
    %v165 = vrot.slane %v116, %v164
    %v170 = vadd.f32 %v153, %v145
    %v171 = vadd.f32 %v157, %v146
    %v172 = vadd.f32 %v161, %v147
    %v173 = vadd.f32 %v165, %v148
    %s174 = scalar_lea.vmem %s1, 1
    %v175 = vld [vmem:[%s174] ss:$2 sm:$0xf]
    %176 = vset.pattern.permute.xlu0 1
    %177 = vperm.xlu0 %176, %v117
    %v178 = vpop.permute.xlu0 %177
    %v181 = vlaneseq
    %v182 = vshrl.u32 %v181, 7
    %v183 = vsub.s32 0, %v182
    %v184 = vrot.slane %v175, %v183
    %v185 = vlaneseq
    %v186 = vshrl.u32 %v185, 7
    %v187 = vsub.s32 1, %v186
    %v188 = vrot.slane %v175, %v187
    %v189 = vlaneseq
    %v190 = vshrl.u32 %v189, 7
    %v191 = vsub.s32 2, %v190
    %v192 = vrot.slane %v175, %v191
    %v193 = vlaneseq
    %v194 = vshrl.u32 %v193, 7
    %v195 = vsub.s32 3, %v194
    %v196 = vrot.slane %v175, %v195
    %v201 = vmul.f32 %v178, %v184
    %v202 = vmul.f32 %v178, %v188
    %v203 = vmul.f32 %v178, %v192
    %v204 = vmul.f32 %v178, %v196
    %v205 = vadd.f32 %v170, %v201
    %v206 = vadd.f32 %v171, %v202
    %v207 = vadd.f32 %v172, %v203
    %v208 = vadd.f32 %v173, %v204
    %209 = vmatprep.subr.mxu0 %v53
    %210 = vmatpush1.msra.mxu0 %v52
    %211 = vmatprep.subr.mxu0 %v57
    %212 = vmatpush1.msra.mxu0 %v56
    %213 = vmatprep.subr.mxu0 %v61
    %214 = vmatpush1.msra.mxu0 %v60
    %215 = vmatprep.subr.mxu0 %v65
    %216 = vmatpush1.msra.mxu0 %v64
    %217 = vmatprep.subr.mxu0 %v69
    %218 = vmatpush1.msra.mxu0 %v68
    %219 = vmatprep.subr.mxu0 %v73
    %220 = vmatpush1.msra.mxu0 %v72
    %221 = vmatprep.subr.mxu0 %v77
    %222 = vmatpush1.msra.mxu0 %v76
    %223 = vmatprep.subr.mxu0 %v81
    %224 = vmatpush1.msra.mxu0 %v80
    %225 = vmatprep.subr.mxu0 %v85
    %226 = vmatpush1.msra.mxu0 %v84
    %227 = vmatprep.subr.mxu0 %v89
    %228 = vmatpush1.msra.mxu0 %v88
    %229 = vmatprep.subr.mxu0 %v93
    %230 = vmatpush1.msra.mxu0 %v92
    %231 = vmatprep.subr.mxu0 %v97
    %232 = vmatpush1.msra.mxu0 %v96
    %233 = vmatprep.subr.mxu0 %v101
    %234 = vmatpush1.msra.mxu0 %v100
    %235 = vmatprep.subr.mxu0 %v105
    %236 = vmatpush1.msra.mxu0 %v104
    %237 = vmatprep.subr.mxu0 %v109
    %238 = vmatpush1.msra.mxu0 %v108
    %239 = vmatprep.subr.mxu0 %v113
    %240 = vmatpush1.msra.mxu0 %v112
    %241 = vmatprep.subr.mxu0 0.0
    %242 = vmatpush1.msra.mxu0 0.0
    %243 = vmatprep.subr.mxu0 0.0
    %244 = vmatpush1.msra.mxu0 0.0
    %245 = vmatprep.subr.mxu0 0.0
    %246 = vmatpush1.msra.mxu0 0.0
    %247 = vmatprep.subr.mxu0 0.0
    %248 = vmatpush1.msra.mxu0 0.0
    %249 = vmatprep.subr.mxu0 0.0
    %250 = vmatpush1.msra.mxu0 0.0
    %251 = vmatprep.subr.mxu0 0.0
    %252 = vmatpush1.msra.mxu0 0.0
    %253 = vmatprep.subr.mxu0 0.0
    %254 = vmatpush1.msra.mxu0 0.0
    %255 = vmatprep.subr.mxu0 0.0
    %256 = vmatpush1.msra.mxu0 0.0
    %257 = vmatprep.subr.mxu0 0.0
    %258 = vmatpush1.msra.mxu0 0.0
    %259 = vmatprep.subr.mxu0 0.0
    %260 = vmatpush1.msra.mxu0 0.0
    %261 = vmatprep.subr.mxu0 0.0
    %262 = vmatpush1.msra.mxu0 0.0
    %263 = vmatprep.subr.mxu0 0.0
    %264 = vmatpush1.msra.mxu0 0.0
    %265 = vmatprep.subr.mxu0 0.0
    %266 = vmatpush1.msra.mxu0 0.0
    %267 = vmatprep.subr.mxu0 0.0
    %268 = vmatpush1.msra.mxu0 0.0
    %269 = vmatprep.subr.mxu0 0.0
    %270 = vmatpush1.msra.mxu0 0.0
    %271 = vmatprep.subr.mxu0 0.0
    %272 = vmatpush1.msra.mxu0 0.0
    %273 = vmatprep.mubr.f32.mxu0 0.0
    %274 = vmatmul.mubr.f32.gmra.mrb[0].mxu0 0.0
    %v275 = vpop.f32.mrb[0].mxu0
    %v276 = vadd.f32 0.0, %v275
    %v277 = vpop.f32.mrb[0].mxu0
    %v278 = vadd.f32 0.0, %v277
    %279 = vdwg.mxu0
    %280 = vmatprep.subr.mxu0 %v55
    %281 = vmatpush1.msra.mxu0 %v54
    %282 = vmatprep.subr.mxu0 %v59
    %283 = vmatpush1.msra.mxu0 %v58
    %284 = vmatprep.subr.mxu0 %v63
    %285 = vmatpush1.msra.mxu0 %v62
    %286 = vmatprep.subr.mxu0 %v67
    %287 = vmatpush1.msra.mxu0 %v66
    %288 = vmatprep.subr.mxu0 %v71
    %289 = vmatpush1.msra.mxu0 %v70
    %290 = vmatprep.subr.mxu0 %v75
    %291 = vmatpush1.msra.mxu0 %v74
    %292 = vmatprep.subr.mxu0 %v79
    %293 = vmatpush1.msra.mxu0 %v78
    %294 = vmatprep.subr.mxu0 %v83
    %295 = vmatpush1.msra.mxu0 %v82
    %296 = vmatprep.subr.mxu0 %v87
    %297 = vmatpush1.msra.mxu0 %v86
    %298 = vmatprep.subr.mxu0 %v91
    %299 = vmatpush1.msra.mxu0 %v90
    %300 = vmatprep.subr.mxu0 %v95
    %301 = vmatpush1.msra.mxu0 %v94
    %302 = vmatprep.subr.mxu0 %v99
    %303 = vmatpush1.msra.mxu0 %v98
    %304 = vmatprep.subr.mxu0 %v103
    %305 = vmatpush1.msra.mxu0 %v102
    %306 = vmatprep.subr.mxu0 %v107
    %307 = vmatpush1.msra.mxu0 %v106
    %308 = vmatprep.subr.mxu0 %v111
    %309 = vmatpush1.msra.mxu0 %v110
    %310 = vmatprep.subr.mxu0 %v115
    %311 = vmatpush1.msra.mxu0 %v114
    %312 = vmatprep.subr.mxu0 0.0
    %313 = vmatpush1.msra.mxu0 0.0
    %314 = vmatprep.subr.mxu0 0.0
    %315 = vmatpush1.msra.mxu0 0.0
    %316 = vmatprep.subr.mxu0 0.0
    %317 = vmatpush1.msra.mxu0 0.0
    %318 = vmatprep.subr.mxu0 0.0
    %319 = vmatpush1.msra.mxu0 0.0
    %320 = vmatprep.subr.mxu0 0.0
    %321 = vmatpush1.msra.mxu0 0.0
    %322 = vmatprep.subr.mxu0 0.0
    %323 = vmatpush1.msra.mxu0 0.0
    %324 = vmatprep.subr.mxu0 0.0
    %325 = vmatpush1.msra.mxu0 0.0
    %326 = vmatprep.subr.mxu0 0.0
    %327 = vmatpush1.msra.mxu0 0.0
    %328 = vmatprep.subr.mxu0 0.0
    %329 = vmatpush1.msra.mxu0 0.0
    %330 = vmatprep.subr.mxu0 0.0
    %331 = vmatpush1.msra.mxu0 0.0
    %332 = vmatprep.subr.mxu0 0.0
    %333 = vmatpush1.msra.mxu0 0.0
    %334 = vmatprep.subr.mxu0 0.0
    %335 = vmatpush1.msra.mxu0 0.0
    %336 = vmatprep.subr.mxu0 0.0
    %337 = vmatpush1.msra.mxu0 0.0
    %338 = vmatprep.subr.mxu0 0.0
    %339 = vmatpush1.msra.mxu0 0.0
    %340 = vmatprep.subr.mxu0 0.0
    %341 = vmatpush1.msra.mxu0 0.0
    %342 = vmatprep.subr.mxu0 0.0
    %343 = vmatpush1.msra.mxu0 0.0
    %344 = vmatprep.mubr.f32.mxu0 0.0
    %345 = vmatmul.mubr.f32.gmra.mrb[0].mxu0 0.0
    %v346 = vpop.f32.mrb[0].mxu0
    %v347 = vadd.f32 0.0, %v346
    %v348 = vpop.f32.mrb[0].mxu0
    %v349 = vadd.f32 0.0, %v348
    %350 = vdwg.mxu0
    %v351 = vadd.f32 %v205, %v276
    %v352 = vadd.f32 %v206, %v278
    %v353 = vadd.f32 %v207, %v347
    %v354 = vadd.f32 %v208, %v349
    %v355 = vmul.f32 %v351, 0.5
    %v356 = vtanh.pop %v355
    %v357 = vadd.f32 %v356, 1.0
    %v358 = vmul.f32 %v357, 0.5
    %v359 = vmul.f32 %v352, 0.5
    %v360 = vtanh.pop %v359
    %v361 = vadd.f32 %v360, 1.0
    %v362 = vmul.f32 %v361, 0.5
    %v363 = vtanh.pop %v353
    %v364 = vmul.f32 %v354, 0.5
    %v365 = vtanh.pop %v364
    %v366 = vadd.f32 %v365, 1.0
    %v367 = vmul.f32 %v366, 0.5
    %v368 = vmul.f32 %v362, 0.0
    %v369 = vmul.f32 %v358, %v363
    %v370 = vadd.f32 %v368, %v369
    %v371 = vtanh.pop %v370
    %v372 = vmul.f32 %v367, %v371
    %s373 = scalar_lea.vmem %s0, 8
    %v374 = vld [vmem:[%s373] sm:$0xff]
    %376 = vset.pattern.permute.xlu0 0
    %377 = vperm.xlu0 %376, %v374
    %v378 = vpop.permute.xlu0 %377
    %v380 = vmul.f32 %v378, %v128
    %v381 = vmul.f32 %v378, %v132
    %v382 = vmul.f32 %v378, %v136
    %v383 = vmul.f32 %v378, %v140
    %v384 = vadd.f32 %v153, %v380
    %v385 = vadd.f32 %v157, %v381
    %v386 = vadd.f32 %v161, %v382
    %v387 = vadd.f32 %v165, %v383
    %388 = vset.pattern.permute.xlu0 1
    %389 = vperm.xlu0 %388, %v374
    %v390 = vpop.permute.xlu0 %389
    %v392 = vmul.f32 %v390, %v184
    %v393 = vmul.f32 %v390, %v188
    %v394 = vmul.f32 %v390, %v192
    %v395 = vmul.f32 %v390, %v196
    %v396 = vadd.f32 %v384, %v392
    %v397 = vadd.f32 %v385, %v393
    %v398 = vadd.f32 %v386, %v394
    %v399 = vadd.f32 %v387, %v395
    %400 = vmatprep.subr.mxu0 %v53
    %401 = vmatpush1.msra.mxu0 %v52
    %402 = vmatprep.subr.mxu0 %v57
    %403 = vmatpush1.msra.mxu0 %v56
    %404 = vmatprep.subr.mxu0 %v61
    %405 = vmatpush1.msra.mxu0 %v60
    %406 = vmatprep.subr.mxu0 %v65
    %407 = vmatpush1.msra.mxu0 %v64
    %408 = vmatprep.subr.mxu0 %v69
    %409 = vmatpush1.msra.mxu0 %v68
    %410 = vmatprep.subr.mxu0 %v73
    %411 = vmatpush1.msra.mxu0 %v72
    %412 = vmatprep.subr.mxu0 %v77
    %413 = vmatpush1.msra.mxu0 %v76
    %414 = vmatprep.subr.mxu0 %v81
    %415 = vmatpush1.msra.mxu0 %v80
    %416 = vmatprep.subr.mxu0 %v85
    %417 = vmatpush1.msra.mxu0 %v84
    %418 = vmatprep.subr.mxu0 %v89
    %419 = vmatpush1.msra.mxu0 %v88
    %420 = vmatprep.subr.mxu0 %v93
    %421 = vmatpush1.msra.mxu0 %v92
    %422 = vmatprep.subr.mxu0 %v97
    %423 = vmatpush1.msra.mxu0 %v96
    %424 = vmatprep.subr.mxu0 %v101
    %425 = vmatpush1.msra.mxu0 %v100
    %426 = vmatprep.subr.mxu0 %v105
    %427 = vmatpush1.msra.mxu0 %v104
    %428 = vmatprep.subr.mxu0 %v109
    %429 = vmatpush1.msra.mxu0 %v108
    %430 = vmatprep.subr.mxu0 %v113
    %431 = vmatpush1.msra.mxu0 %v112
    %432 = vmatprep.subr.mxu0 0.0
    %433 = vmatpush1.msra.mxu0 0.0
    %434 = vmatprep.subr.mxu0 0.0
    %435 = vmatpush1.msra.mxu0 0.0
    %436 = vmatprep.subr.mxu0 0.0
    %437 = vmatpush1.msra.mxu0 0.0
    %438 = vmatprep.subr.mxu0 0.0
    %439 = vmatpush1.msra.mxu0 0.0
    %440 = vmatprep.subr.mxu0 0.0
    %441 = vmatpush1.msra.mxu0 0.0
    %442 = vmatprep.subr.mxu0 0.0
    %443 = vmatpush1.msra.mxu0 0.0
    %444 = vmatprep.subr.mxu0 0.0
    %445 = vmatpush1.msra.mxu0 0.0
    %446 = vmatprep.subr.mxu0 0.0
    %447 = vmatpush1.msra.mxu0 0.0
    %448 = vmatprep.subr.mxu0 0.0
    %449 = vmatpush1.msra.mxu0 0.0
    %450 = vmatprep.subr.mxu0 0.0
    %451 = vmatpush1.msra.mxu0 0.0
    %452 = vmatprep.subr.mxu0 0.0
    %453 = vmatpush1.msra.mxu0 0.0
    %454 = vmatprep.subr.mxu0 0.0
    %455 = vmatpush1.msra.mxu0 0.0
    %456 = vmatprep.subr.mxu0 0.0
    %457 = vmatpush1.msra.mxu0 0.0
    %458 = vmatprep.subr.mxu0 0.0
    %459 = vmatpush1.msra.mxu0 0.0
    %460 = vmatprep.subr.mxu0 0.0
    %461 = vmatpush1.msra.mxu0 0.0
    %462 = vmatprep.subr.mxu0 0.0
    %463 = vmatpush1.msra.mxu0 0.0
    %464 = vmatprep.mubr.f32.mxu0 0.0
    %465 = vmatmul.mubr.f32.gmra.mrb[0].mxu0 %v372
    %v466 = vpop.f32.mrb[0].mxu0
    %v467 = vadd.f32 0.0, %v466
    %v468 = vpop.f32.mrb[0].mxu0
    %v469 = vadd.f32 0.0, %v468
    %470 = vdwg.mxu0
    %471 = vmatprep.subr.mxu0 %v55
    %472 = vmatpush1.msra.mxu0 %v54
    %473 = vmatprep.subr.mxu0 %v59
    %474 = vmatpush1.msra.mxu0 %v58
    %475 = vmatprep.subr.mxu0 %v63
    %476 = vmatpush1.msra.mxu0 %v62
    %477 = vmatprep.subr.mxu0 %v67
    %478 = vmatpush1.msra.mxu0 %v66
    %479 = vmatprep.subr.mxu0 %v71
    %480 = vmatpush1.msra.mxu0 %v70
    %481 = vmatprep.subr.mxu0 %v75
    %482 = vmatpush1.msra.mxu0 %v74
    %483 = vmatprep.subr.mxu0 %v79
    %484 = vmatpush1.msra.mxu0 %v78
    %485 = vmatprep.subr.mxu0 %v83
    %486 = vmatpush1.msra.mxu0 %v82
    %487 = vmatprep.subr.mxu0 %v87
    %488 = vmatpush1.msra.mxu0 %v86
    %489 = vmatprep.subr.mxu0 %v91
    %490 = vmatpush1.msra.mxu0 %v90
    %491 = vmatprep.subr.mxu0 %v95
    %492 = vmatpush1.msra.mxu0 %v94
    %493 = vmatprep.subr.mxu0 %v99
    %494 = vmatpush1.msra.mxu0 %v98
    %495 = vmatprep.subr.mxu0 %v103
    %496 = vmatpush1.msra.mxu0 %v102
    %497 = vmatprep.subr.mxu0 %v107
    %498 = vmatpush1.msra.mxu0 %v106
    %499 = vmatprep.subr.mxu0 %v111
    %500 = vmatpush1.msra.mxu0 %v110
    %501 = vmatprep.subr.mxu0 %v115
    %502 = vmatpush1.msra.mxu0 %v114
    %503 = vmatprep.subr.mxu0 0.0
    %504 = vmatpush1.msra.mxu0 0.0
    %505 = vmatprep.subr.mxu0 0.0
    %506 = vmatpush1.msra.mxu0 0.0
    %507 = vmatprep.subr.mxu0 0.0
    %508 = vmatpush1.msra.mxu0 0.0
    %509 = vmatprep.subr.mxu0 0.0
    %510 = vmatpush1.msra.mxu0 0.0
    %511 = vmatprep.subr.mxu0 0.0
    %512 = vmatpush1.msra.mxu0 0.0
    %513 = vmatprep.subr.mxu0 0.0
    %514 = vmatpush1.msra.mxu0 0.0
    %515 = vmatprep.subr.mxu0 0.0
    %516 = vmatpush1.msra.mxu0 0.0
    %517 = vmatprep.subr.mxu0 0.0
    %518 = vmatpush1.msra.mxu0 0.0
    %519 = vmatprep.subr.mxu0 0.0
    %520 = vmatpush1.msra.mxu0 0.0
    %521 = vmatprep.subr.mxu0 0.0
    %522 = vmatpush1.msra.mxu0 0.0
    %523 = vmatprep.subr.mxu0 0.0
    %524 = vmatpush1.msra.mxu0 0.0
    %525 = vmatprep.subr.mxu0 0.0
    %526 = vmatpush1.msra.mxu0 0.0
    %527 = vmatprep.subr.mxu0 0.0
    %528 = vmatpush1.msra.mxu0 0.0
    %529 = vmatprep.subr.mxu0 0.0
    %530 = vmatpush1.msra.mxu0 0.0
    %531 = vmatprep.subr.mxu0 0.0
    %532 = vmatpush1.msra.mxu0 0.0
    %533 = vmatprep.subr.mxu0 0.0
    %534 = vmatpush1.msra.mxu0 0.0
    %535 = vmatprep.mubr.f32.mxu0 0.0
    %536 = vmatmul.mubr.f32.gmra.mrb[0].mxu0 %v372
    %v537 = vpop.f32.mrb[0].mxu0
    %v538 = vadd.f32 0.0, %v537
    %v539 = vpop.f32.mrb[0].mxu0
    %v540 = vadd.f32 0.0, %v539
    %541 = vdwg.mxu0
    %v542 = vadd.f32 %v396, %v467
    %v543 = vadd.f32 %v397, %v469
    %v544 = vadd.f32 %v398, %v538
    %v545 = vadd.f32 %v399, %v540
    %v546 = vmul.f32 %v542, 0.5
    %v547 = vtanh.pop %v546
    %v548 = vadd.f32 %v547, 1.0
    %v549 = vmul.f32 %v548, 0.5
    %v550 = vmul.f32 %v543, 0.5
    %v551 = vtanh.pop %v550
    %v552 = vadd.f32 %v551, 1.0
    %v553 = vmul.f32 %v552, 0.5
    %v554 = vtanh.pop %v544
    %v555 = vmul.f32 %v545, 0.5
    %v556 = vtanh.pop %v555
    %v557 = vadd.f32 %v556, 1.0
    %v558 = vmul.f32 %v557, 0.5
    %v559 = vmul.f32 %v553, %v370
    %v560 = vmul.f32 %v549, %v554
    %v561 = vadd.f32 %v559, %v560
    %v562 = vtanh.pop %v561
    %v563 = vmul.f32 %v558, %v562
    %s564 = scalar_lea.vmem %s0, 16
    %v565 = vld [vmem:[%s564] sm:$0xff]
    %567 = vset.pattern.permute.xlu0 0
    %568 = vperm.xlu0 %567, %v565
    %v569 = vpop.permute.xlu0 %568
    %v571 = vmul.f32 %v569, %v128
    %v572 = vmul.f32 %v569, %v132
    %v573 = vmul.f32 %v569, %v136
    %v574 = vmul.f32 %v569, %v140
    %v575 = vadd.f32 %v153, %v571
    %v576 = vadd.f32 %v157, %v572
    %v577 = vadd.f32 %v161, %v573
    %v578 = vadd.f32 %v165, %v574
    %579 = vset.pattern.permute.xlu0 1
    %580 = vperm.xlu0 %579, %v565
    %v581 = vpop.permute.xlu0 %580
    %v583 = vmul.f32 %v581, %v184
    %v584 = vmul.f32 %v581, %v188
    %v585 = vmul.f32 %v581, %v192
    %v586 = vmul.f32 %v581, %v196
    %v587 = vadd.f32 %v575, %v583
    %v588 = vadd.f32 %v576, %v584
    %v589 = vadd.f32 %v577, %v585
    %v590 = vadd.f32 %v578, %v586
    %591 = vmatprep.subr.mxu0 %v53
    %592 = vmatpush1.msra.mxu0 %v52
    %593 = vmatprep.subr.mxu0 %v57
    %594 = vmatpush1.msra.mxu0 %v56
    %595 = vmatprep.subr.mxu0 %v61
    %596 = vmatpush1.msra.mxu0 %v60
    %597 = vmatprep.subr.mxu0 %v65
    %598 = vmatpush1.msra.mxu0 %v64
    %599 = vmatprep.subr.mxu0 %v69
    %600 = vmatpush1.msra.mxu0 %v68
    %601 = vmatprep.subr.mxu0 %v73
    %602 = vmatpush1.msra.mxu0 %v72
    %603 = vmatprep.subr.mxu0 %v77
    %604 = vmatpush1.msra.mxu0 %v76
    %605 = vmatprep.subr.mxu0 %v81
    %606 = vmatpush1.msra.mxu0 %v80
    %607 = vmatprep.subr.mxu0 %v85
    %608 = vmatpush1.msra.mxu0 %v84
    %609 = vmatprep.subr.mxu0 %v89
    %610 = vmatpush1.msra.mxu0 %v88
    %611 = vmatprep.subr.mxu0 %v93
    %612 = vmatpush1.msra.mxu0 %v92
    %613 = vmatprep.subr.mxu0 %v97
    %614 = vmatpush1.msra.mxu0 %v96
    %615 = vmatprep.subr.mxu0 %v101
    %616 = vmatpush1.msra.mxu0 %v100
    %617 = vmatprep.subr.mxu0 %v105
    %618 = vmatpush1.msra.mxu0 %v104
    %619 = vmatprep.subr.mxu0 %v109
    %620 = vmatpush1.msra.mxu0 %v108
    %621 = vmatprep.subr.mxu0 %v113
    %622 = vmatpush1.msra.mxu0 %v112
    %623 = vmatprep.subr.mxu0 0.0
    %624 = vmatpush1.msra.mxu0 0.0
    %625 = vmatprep.subr.mxu0 0.0
    %626 = vmatpush1.msra.mxu0 0.0
    %627 = vmatprep.subr.mxu0 0.0
    %628 = vmatpush1.msra.mxu0 0.0
    %629 = vmatprep.subr.mxu0 0.0
    %630 = vmatpush1.msra.mxu0 0.0
    %631 = vmatprep.subr.mxu0 0.0
    %632 = vmatpush1.msra.mxu0 0.0
    %633 = vmatprep.subr.mxu0 0.0
    %634 = vmatpush1.msra.mxu0 0.0
    %635 = vmatprep.subr.mxu0 0.0
    %636 = vmatpush1.msra.mxu0 0.0
    %637 = vmatprep.subr.mxu0 0.0
    %638 = vmatpush1.msra.mxu0 0.0
    %639 = vmatprep.subr.mxu0 0.0
    %640 = vmatpush1.msra.mxu0 0.0
    %641 = vmatprep.subr.mxu0 0.0
    %642 = vmatpush1.msra.mxu0 0.0
    %643 = vmatprep.subr.mxu0 0.0
    %644 = vmatpush1.msra.mxu0 0.0
    %645 = vmatprep.subr.mxu0 0.0
    %646 = vmatpush1.msra.mxu0 0.0
    %647 = vmatprep.subr.mxu0 0.0
    %648 = vmatpush1.msra.mxu0 0.0
    %649 = vmatprep.subr.mxu0 0.0
    %650 = vmatpush1.msra.mxu0 0.0
    %651 = vmatprep.subr.mxu0 0.0
    %652 = vmatpush1.msra.mxu0 0.0
    %653 = vmatprep.subr.mxu0 0.0
    %654 = vmatpush1.msra.mxu0 0.0
    %655 = vmatprep.mubr.f32.mxu0 0.0
    %656 = vmatmul.mubr.f32.gmra.mrb[0].mxu0 %v563
    %v657 = vpop.f32.mrb[0].mxu0
    %v658 = vadd.f32 0.0, %v657
    %v659 = vpop.f32.mrb[0].mxu0
    %v660 = vadd.f32 0.0, %v659
    %661 = vdwg.mxu0
    %662 = vmatprep.subr.mxu0 %v55
    %663 = vmatpush1.msra.mxu0 %v54
    %664 = vmatprep.subr.mxu0 %v59
    %665 = vmatpush1.msra.mxu0 %v58
    %666 = vmatprep.subr.mxu0 %v63
    %667 = vmatpush1.msra.mxu0 %v62
    %668 = vmatprep.subr.mxu0 %v67
    %669 = vmatpush1.msra.mxu0 %v66
    %670 = vmatprep.subr.mxu0 %v71
    %671 = vmatpush1.msra.mxu0 %v70
    %672 = vmatprep.subr.mxu0 %v75
    %673 = vmatpush1.msra.mxu0 %v74
    %674 = vmatprep.subr.mxu0 %v79
    %675 = vmatpush1.msra.mxu0 %v78
    %676 = vmatprep.subr.mxu0 %v83
    %677 = vmatpush1.msra.mxu0 %v82
    %678 = vmatprep.subr.mxu0 %v87
    %679 = vmatpush1.msra.mxu0 %v86
    %680 = vmatprep.subr.mxu0 %v91
    %681 = vmatpush1.msra.mxu0 %v90
    %682 = vmatprep.subr.mxu0 %v95
    %683 = vmatpush1.msra.mxu0 %v94
    %684 = vmatprep.subr.mxu0 %v99
    %685 = vmatpush1.msra.mxu0 %v98
    %686 = vmatprep.subr.mxu0 %v103
    %687 = vmatpush1.msra.mxu0 %v102
    %688 = vmatprep.subr.mxu0 %v107
    %689 = vmatpush1.msra.mxu0 %v106
    %690 = vmatprep.subr.mxu0 %v111
    %691 = vmatpush1.msra.mxu0 %v110
    %692 = vmatprep.subr.mxu0 %v115
    %693 = vmatpush1.msra.mxu0 %v114
    %694 = vmatprep.subr.mxu0 0.0
    %695 = vmatpush1.msra.mxu0 0.0
    %696 = vmatprep.subr.mxu0 0.0
    %697 = vmatpush1.msra.mxu0 0.0
    %698 = vmatprep.subr.mxu0 0.0
    %699 = vmatpush1.msra.mxu0 0.0
    %700 = vmatprep.subr.mxu0 0.0
    %701 = vmatpush1.msra.mxu0 0.0
    %702 = vmatprep.subr.mxu0 0.0
    %703 = vmatpush1.msra.mxu0 0.0
    %704 = vmatprep.subr.mxu0 0.0
    %705 = vmatpush1.msra.mxu0 0.0
    %706 = vmatprep.subr.mxu0 0.0
    %707 = vmatpush1.msra.mxu0 0.0
    %708 = vmatprep.subr.mxu0 0.0
    %709 = vmatpush1.msra.mxu0 0.0
    %710 = vmatprep.subr.mxu0 0.0
    %711 = vmatpush1.msra.mxu0 0.0
    %712 = vmatprep.subr.mxu0 0.0
    %713 = vmatpush1.msra.mxu0 0.0
    %714 = vmatprep.subr.mxu0 0.0
    %715 = vmatpush1.msra.mxu0 0.0
    %716 = vmatprep.subr.mxu0 0.0
    %717 = vmatpush1.msra.mxu0 0.0
    %718 = vmatprep.subr.mxu0 0.0
    %719 = vmatpush1.msra.mxu0 0.0
    %720 = vmatprep.subr.mxu0 0.0
    %721 = vmatpush1.msra.mxu0 0.0
    %722 = vmatprep.subr.mxu0 0.0
    %723 = vmatpush1.msra.mxu0 0.0
    %724 = vmatprep.subr.mxu0 0.0
    %725 = vmatpush1.msra.mxu0 0.0
    %726 = vmatprep.mubr.f32.mxu0 0.0
    %727 = vmatmul.mubr.f32.gmra.mrb[0].mxu0 %v563
    %v728 = vpop.f32.mrb[0].mxu0
    %v729 = vadd.f32 0.0, %v728
    %v730 = vpop.f32.mrb[0].mxu0
    %v731 = vadd.f32 0.0, %v730
    %732 = vdwg.mxu0
    %v733 = vadd.f32 %v587, %v658
    %v734 = vadd.f32 %v588, %v660
    %v735 = vadd.f32 %v589, %v729
    %v736 = vadd.f32 %v590, %v731
    %v737 = vmul.f32 %v733, 0.5
    %v738 = vtanh.pop %v737
    %v739 = vadd.f32 %v738, 1.0
    %v740 = vmul.f32 %v739, 0.5
    %v741 = vmul.f32 %v734, 0.5
    %v742 = vtanh.pop %v741
    %v743 = vadd.f32 %v742, 1.0
    %v744 = vmul.f32 %v743, 0.5
    %v745 = vtanh.pop %v735
    %v746 = vmul.f32 %v736, 0.5
    %v747 = vtanh.pop %v746
    %v748 = vadd.f32 %v747, 1.0
    %v749 = vmul.f32 %v748, 0.5
    %v750 = vmul.f32 %v744, %v561
    %v751 = vmul.f32 %v740, %v745
    %v752 = vadd.f32 %v750, %v751
    %v753 = vtanh.pop %v752
    %v754 = vmul.f32 %v749, %v753
    %s755 = scalar_lea.vmem %s0, 24
    %v756 = vld [vmem:[%s755] sm:$0xff]
    %758 = vset.pattern.permute.xlu0 0
    %759 = vperm.xlu0 %758, %v756
    %v760 = vpop.permute.xlu0 %759
    %v762 = vmul.f32 %v760, %v128
    %v763 = vmul.f32 %v760, %v132
    %v764 = vmul.f32 %v760, %v136
    %v765 = vmul.f32 %v760, %v140
    %v766 = vadd.f32 %v153, %v762
    %v767 = vadd.f32 %v157, %v763
    %v768 = vadd.f32 %v161, %v764
    %v769 = vadd.f32 %v165, %v765
    %770 = vset.pattern.permute.xlu0 1
    %771 = vperm.xlu0 %770, %v756
    %v772 = vpop.permute.xlu0 %771
    %v774 = vmul.f32 %v772, %v184
    %v775 = vmul.f32 %v772, %v188
    %v776 = vmul.f32 %v772, %v192
    %v777 = vmul.f32 %v772, %v196
    %v778 = vadd.f32 %v766, %v774
    %v779 = vadd.f32 %v767, %v775
    %v780 = vadd.f32 %v768, %v776
    %v781 = vadd.f32 %v769, %v777
    %782 = vmatprep.subr.mxu0 %v53
    %783 = vmatpush1.msra.mxu0 %v52
    %784 = vmatprep.subr.mxu0 %v57
    %785 = vmatpush1.msra.mxu0 %v56
    %786 = vmatprep.subr.mxu0 %v61
    %787 = vmatpush1.msra.mxu0 %v60
    %788 = vmatprep.subr.mxu0 %v65
    %789 = vmatpush1.msra.mxu0 %v64
    %790 = vmatprep.subr.mxu0 %v69
    %791 = vmatpush1.msra.mxu0 %v68
    %792 = vmatprep.subr.mxu0 %v73
    %793 = vmatpush1.msra.mxu0 %v72
    %794 = vmatprep.subr.mxu0 %v77
    %795 = vmatpush1.msra.mxu0 %v76
    %796 = vmatprep.subr.mxu0 %v81
    %797 = vmatpush1.msra.mxu0 %v80
    %798 = vmatprep.subr.mxu0 %v85
    %799 = vmatpush1.msra.mxu0 %v84
    %800 = vmatprep.subr.mxu0 %v89
    %801 = vmatpush1.msra.mxu0 %v88
    %802 = vmatprep.subr.mxu0 %v93
    %803 = vmatpush1.msra.mxu0 %v92
    %804 = vmatprep.subr.mxu0 %v97
    %805 = vmatpush1.msra.mxu0 %v96
    %806 = vmatprep.subr.mxu0 %v101
    %807 = vmatpush1.msra.mxu0 %v100
    %808 = vmatprep.subr.mxu0 %v105
    %809 = vmatpush1.msra.mxu0 %v104
    %810 = vmatprep.subr.mxu0 %v109
    %811 = vmatpush1.msra.mxu0 %v108
    %812 = vmatprep.subr.mxu0 %v113
    %813 = vmatpush1.msra.mxu0 %v112
    %814 = vmatprep.subr.mxu0 0.0
    %815 = vmatpush1.msra.mxu0 0.0
    %816 = vmatprep.subr.mxu0 0.0
    %817 = vmatpush1.msra.mxu0 0.0
    %818 = vmatprep.subr.mxu0 0.0
    %819 = vmatpush1.msra.mxu0 0.0
    %820 = vmatprep.subr.mxu0 0.0
    %821 = vmatpush1.msra.mxu0 0.0
    %822 = vmatprep.subr.mxu0 0.0
    %823 = vmatpush1.msra.mxu0 0.0
    %824 = vmatprep.subr.mxu0 0.0
    %825 = vmatpush1.msra.mxu0 0.0
    %826 = vmatprep.subr.mxu0 0.0
    %827 = vmatpush1.msra.mxu0 0.0
    %828 = vmatprep.subr.mxu0 0.0
    %829 = vmatpush1.msra.mxu0 0.0
    %830 = vmatprep.subr.mxu0 0.0
    %831 = vmatpush1.msra.mxu0 0.0
    %832 = vmatprep.subr.mxu0 0.0
    %833 = vmatpush1.msra.mxu0 0.0
    %834 = vmatprep.subr.mxu0 0.0
    %835 = vmatpush1.msra.mxu0 0.0
    %836 = vmatprep.subr.mxu0 0.0
    %837 = vmatpush1.msra.mxu0 0.0
    %838 = vmatprep.subr.mxu0 0.0
    %839 = vmatpush1.msra.mxu0 0.0
    %840 = vmatprep.subr.mxu0 0.0
    %841 = vmatpush1.msra.mxu0 0.0
    %842 = vmatprep.subr.mxu0 0.0
    %843 = vmatpush1.msra.mxu0 0.0
    %844 = vmatprep.subr.mxu0 0.0
    %845 = vmatpush1.msra.mxu0 0.0
    %846 = vmatprep.mubr.f32.mxu0 0.0
    %847 = vmatmul.mubr.f32.gmra.mrb[0].mxu0 %v754
    %v848 = vpop.f32.mrb[0].mxu0
    %v849 = vadd.f32 0.0, %v848
    %v850 = vpop.f32.mrb[0].mxu0
    %v851 = vadd.f32 0.0, %v850
    %852 = vdwg.mxu0
    %853 = vmatprep.subr.mxu0 %v55
    %854 = vmatpush1.msra.mxu0 %v54
    %855 = vmatprep.subr.mxu0 %v59
    %856 = vmatpush1.msra.mxu0 %v58
    %857 = vmatprep.subr.mxu0 %v63
    %858 = vmatpush1.msra.mxu0 %v62
    %859 = vmatprep.subr.mxu0 %v67
    %860 = vmatpush1.msra.mxu0 %v66
    %861 = vmatprep.subr.mxu0 %v71
    %862 = vmatpush1.msra.mxu0 %v70
    %863 = vmatprep.subr.mxu0 %v75
    %864 = vmatpush1.msra.mxu0 %v74
    %865 = vmatprep.subr.mxu0 %v79
    %866 = vmatpush1.msra.mxu0 %v78
    %867 = vmatprep.subr.mxu0 %v83
    %868 = vmatpush1.msra.mxu0 %v82
    %869 = vmatprep.subr.mxu0 %v87
    %870 = vmatpush1.msra.mxu0 %v86
    %871 = vmatprep.subr.mxu0 %v91
    %872 = vmatpush1.msra.mxu0 %v90
    %873 = vmatprep.subr.mxu0 %v95
    %874 = vmatpush1.msra.mxu0 %v94
    %875 = vmatprep.subr.mxu0 %v99
    %876 = vmatpush1.msra.mxu0 %v98
    %877 = vmatprep.subr.mxu0 %v103
    %878 = vmatpush1.msra.mxu0 %v102
    %879 = vmatprep.subr.mxu0 %v107
    %880 = vmatpush1.msra.mxu0 %v106
    %881 = vmatprep.subr.mxu0 %v111
    %882 = vmatpush1.msra.mxu0 %v110
    %883 = vmatprep.subr.mxu0 %v115
    %884 = vmatpush1.msra.mxu0 %v114
    %885 = vmatprep.subr.mxu0 0.0
    %886 = vmatpush1.msra.mxu0 0.0
    %887 = vmatprep.subr.mxu0 0.0
    %888 = vmatpush1.msra.mxu0 0.0
    %889 = vmatprep.subr.mxu0 0.0
    %890 = vmatpush1.msra.mxu0 0.0
    %891 = vmatprep.subr.mxu0 0.0
    %892 = vmatpush1.msra.mxu0 0.0
    %893 = vmatprep.subr.mxu0 0.0
    %894 = vmatpush1.msra.mxu0 0.0
    %895 = vmatprep.subr.mxu0 0.0
    %896 = vmatpush1.msra.mxu0 0.0
    %897 = vmatprep.subr.mxu0 0.0
    %898 = vmatpush1.msra.mxu0 0.0
    %899 = vmatprep.subr.mxu0 0.0
    %900 = vmatpush1.msra.mxu0 0.0
    %901 = vmatprep.subr.mxu0 0.0
    %902 = vmatpush1.msra.mxu0 0.0
    %903 = vmatprep.subr.mxu0 0.0
    %904 = vmatpush1.msra.mxu0 0.0
    %905 = vmatprep.subr.mxu0 0.0
    %906 = vmatpush1.msra.mxu0 0.0
    %907 = vmatprep.subr.mxu0 0.0
    %908 = vmatpush1.msra.mxu0 0.0
    %909 = vmatprep.subr.mxu0 0.0
    %910 = vmatpush1.msra.mxu0 0.0
    %911 = vmatprep.subr.mxu0 0.0
    %912 = vmatpush1.msra.mxu0 0.0
    %913 = vmatprep.subr.mxu0 0.0
    %914 = vmatpush1.msra.mxu0 0.0
    %915 = vmatprep.subr.mxu0 0.0
    %916 = vmatpush1.msra.mxu0 0.0
    %917 = vmatprep.mubr.f32.mxu0 0.0
    %918 = vmatmul.mubr.f32.gmra.mrb[0].mxu0 %v754
    %v919 = vpop.f32.mrb[0].mxu0
    %v920 = vadd.f32 0.0, %v919
    %v921 = vpop.f32.mrb[0].mxu0
    %v922 = vadd.f32 0.0, %v921
    %923 = vdwg.mxu0
    %v924 = vadd.f32 %v778, %v849
    %v925 = vadd.f32 %v779, %v851
    %v926 = vadd.f32 %v780, %v920
    %v927 = vadd.f32 %v781, %v922
    %v928 = vmul.f32 %v924, 0.5
    %v929 = vtanh.pop %v928
    %v930 = vadd.f32 %v929, 1.0
    %v931 = vmul.f32 %v930, 0.5
    %v932 = vmul.f32 %v925, 0.5
    %v933 = vtanh.pop %v932
    %v934 = vadd.f32 %v933, 1.0
    %v935 = vmul.f32 %v934, 0.5
    %v936 = vtanh.pop %v926
    %v937 = vmul.f32 %v927, 0.5
    %v938 = vtanh.pop %v937
    %v939 = vadd.f32 %v938, 1.0
    %v940 = vmul.f32 %v939, 0.5
    %v941 = vmul.f32 %v935, %v752
    %v942 = vmul.f32 %v931, %v936
    %v943 = vadd.f32 %v941, %v942
    %v944 = vtanh.pop %v943
    %v945 = vmul.f32 %v940, %v944
    %s946 = scalar_lea.vmem %s0, 32
    %v947 = vld [vmem:[%s946] sm:$0xff]
    %949 = vset.pattern.permute.xlu0 0
    %950 = vperm.xlu0 %949, %v947
    %v951 = vpop.permute.xlu0 %950
    %v953 = vmul.f32 %v951, %v128
    %v954 = vmul.f32 %v951, %v132
    %v955 = vmul.f32 %v951, %v136
    %v956 = vmul.f32 %v951, %v140
    %v957 = vadd.f32 %v153, %v953
    %v958 = vadd.f32 %v157, %v954
    %v959 = vadd.f32 %v161, %v955
    %v960 = vadd.f32 %v165, %v956
    %961 = vset.pattern.permute.xlu0 1
    %962 = vperm.xlu0 %961, %v947
    %v963 = vpop.permute.xlu0 %962
    %v965 = vmul.f32 %v963, %v184
    %v966 = vmul.f32 %v963, %v188
    %v967 = vmul.f32 %v963, %v192
    %v968 = vmul.f32 %v963, %v196
    %v969 = vadd.f32 %v957, %v965
    %v970 = vadd.f32 %v958, %v966
    %v971 = vadd.f32 %v959, %v967
    %v972 = vadd.f32 %v960, %v968
    %973 = vmatprep.subr.mxu0 %v53
    %974 = vmatpush1.msra.mxu0 %v52
    %975 = vmatprep.subr.mxu0 %v57
    %976 = vmatpush1.msra.mxu0 %v56
    %977 = vmatprep.subr.mxu0 %v61
    %978 = vmatpush1.msra.mxu0 %v60
    %979 = vmatprep.subr.mxu0 %v65
    %980 = vmatpush1.msra.mxu0 %v64
    %981 = vmatprep.subr.mxu0 %v69
    %982 = vmatpush1.msra.mxu0 %v68
    %983 = vmatprep.subr.mxu0 %v73
    %984 = vmatpush1.msra.mxu0 %v72
    %985 = vmatprep.subr.mxu0 %v77
    %986 = vmatpush1.msra.mxu0 %v76
    %987 = vmatprep.subr.mxu0 %v81
    %988 = vmatpush1.msra.mxu0 %v80
    %989 = vmatprep.subr.mxu0 %v85
    %990 = vmatpush1.msra.mxu0 %v84
    %991 = vmatprep.subr.mxu0 %v89
    %992 = vmatpush1.msra.mxu0 %v88
    %993 = vmatprep.subr.mxu0 %v93
    %994 = vmatpush1.msra.mxu0 %v92
    %995 = vmatprep.subr.mxu0 %v97
    %996 = vmatpush1.msra.mxu0 %v96
    %997 = vmatprep.subr.mxu0 %v101
    %998 = vmatpush1.msra.mxu0 %v100
    %999 = vmatprep.subr.mxu0 %v105
    %1000 = vmatpush1.msra.mxu0 %v104
    %1001 = vmatprep.subr.mxu0 %v109
    %1002 = vmatpush1.msra.mxu0 %v108
    %1003 = vmatprep.subr.mxu0 %v113
    %1004 = vmatpush1.msra.mxu0 %v112
    %1005 = vmatprep.subr.mxu0 0.0
    %1006 = vmatpush1.msra.mxu0 0.0
    %1007 = vmatprep.subr.mxu0 0.0
    %1008 = vmatpush1.msra.mxu0 0.0
    %1009 = vmatprep.subr.mxu0 0.0
    %1010 = vmatpush1.msra.mxu0 0.0
    %1011 = vmatprep.subr.mxu0 0.0
    %1012 = vmatpush1.msra.mxu0 0.0
    %1013 = vmatprep.subr.mxu0 0.0
    %1014 = vmatpush1.msra.mxu0 0.0
    %1015 = vmatprep.subr.mxu0 0.0
    %1016 = vmatpush1.msra.mxu0 0.0
    %1017 = vmatprep.subr.mxu0 0.0
    %1018 = vmatpush1.msra.mxu0 0.0
    %1019 = vmatprep.subr.mxu0 0.0
    %1020 = vmatpush1.msra.mxu0 0.0
    %1021 = vmatprep.subr.mxu0 0.0
    %1022 = vmatpush1.msra.mxu0 0.0
    %1023 = vmatprep.subr.mxu0 0.0
    %1024 = vmatpush1.msra.mxu0 0.0
    %1025 = vmatprep.subr.mxu0 0.0
    %1026 = vmatpush1.msra.mxu0 0.0
    %1027 = vmatprep.subr.mxu0 0.0
    %1028 = vmatpush1.msra.mxu0 0.0
    %1029 = vmatprep.subr.mxu0 0.0
    %1030 = vmatpush1.msra.mxu0 0.0
    %1031 = vmatprep.subr.mxu0 0.0
    %1032 = vmatpush1.msra.mxu0 0.0
    %1033 = vmatprep.subr.mxu0 0.0
    %1034 = vmatpush1.msra.mxu0 0.0
    %1035 = vmatprep.subr.mxu0 0.0
    %1036 = vmatpush1.msra.mxu0 0.0
    %1037 = vmatprep.mubr.f32.mxu0 0.0
    %1038 = vmatmul.mubr.f32.gmra.mrb[0].mxu0 %v945
    %v1039 = vpop.f32.mrb[0].mxu0
    %v1040 = vadd.f32 0.0, %v1039
    %v1041 = vpop.f32.mrb[0].mxu0
    %v1042 = vadd.f32 0.0, %v1041
    %1043 = vdwg.mxu0
    %1044 = vmatprep.subr.mxu0 %v55
    %1045 = vmatpush1.msra.mxu0 %v54
    %1046 = vmatprep.subr.mxu0 %v59
    %1047 = vmatpush1.msra.mxu0 %v58
    %1048 = vmatprep.subr.mxu0 %v63
    %1049 = vmatpush1.msra.mxu0 %v62
    %1050 = vmatprep.subr.mxu0 %v67
    %1051 = vmatpush1.msra.mxu0 %v66
    %1052 = vmatprep.subr.mxu0 %v71
    %1053 = vmatpush1.msra.mxu0 %v70
    %1054 = vmatprep.subr.mxu0 %v75
    %1055 = vmatpush1.msra.mxu0 %v74
    %1056 = vmatprep.subr.mxu0 %v79
    %1057 = vmatpush1.msra.mxu0 %v78
    %1058 = vmatprep.subr.mxu0 %v83
    %1059 = vmatpush1.msra.mxu0 %v82
    %1060 = vmatprep.subr.mxu0 %v87
    %1061 = vmatpush1.msra.mxu0 %v86
    %1062 = vmatprep.subr.mxu0 %v91
    %1063 = vmatpush1.msra.mxu0 %v90
    %1064 = vmatprep.subr.mxu0 %v95
    %1065 = vmatpush1.msra.mxu0 %v94
    %1066 = vmatprep.subr.mxu0 %v99
    %1067 = vmatpush1.msra.mxu0 %v98
    %1068 = vmatprep.subr.mxu0 %v103
    %1069 = vmatpush1.msra.mxu0 %v102
    %1070 = vmatprep.subr.mxu0 %v107
    %1071 = vmatpush1.msra.mxu0 %v106
    %1072 = vmatprep.subr.mxu0 %v111
    %1073 = vmatpush1.msra.mxu0 %v110
    %1074 = vmatprep.subr.mxu0 %v115
    %1075 = vmatpush1.msra.mxu0 %v114
    %1076 = vmatprep.subr.mxu0 0.0
    %1077 = vmatpush1.msra.mxu0 0.0
    %1078 = vmatprep.subr.mxu0 0.0
    %1079 = vmatpush1.msra.mxu0 0.0
    %1080 = vmatprep.subr.mxu0 0.0
    %1081 = vmatpush1.msra.mxu0 0.0
    %1082 = vmatprep.subr.mxu0 0.0
    %1083 = vmatpush1.msra.mxu0 0.0
    %1084 = vmatprep.subr.mxu0 0.0
    %1085 = vmatpush1.msra.mxu0 0.0
    %1086 = vmatprep.subr.mxu0 0.0
    %1087 = vmatpush1.msra.mxu0 0.0
    %1088 = vmatprep.subr.mxu0 0.0
    %1089 = vmatpush1.msra.mxu0 0.0
    %1090 = vmatprep.subr.mxu0 0.0
    %1091 = vmatpush1.msra.mxu0 0.0
    %1092 = vmatprep.subr.mxu0 0.0
    %1093 = vmatpush1.msra.mxu0 0.0
    %1094 = vmatprep.subr.mxu0 0.0
    %1095 = vmatpush1.msra.mxu0 0.0
    %1096 = vmatprep.subr.mxu0 0.0
    %1097 = vmatpush1.msra.mxu0 0.0
    %1098 = vmatprep.subr.mxu0 0.0
    %1099 = vmatpush1.msra.mxu0 0.0
    %1100 = vmatprep.subr.mxu0 0.0
    %1101 = vmatpush1.msra.mxu0 0.0
    %1102 = vmatprep.subr.mxu0 0.0
    %1103 = vmatpush1.msra.mxu0 0.0
    %1104 = vmatprep.subr.mxu0 0.0
    %1105 = vmatpush1.msra.mxu0 0.0
    %1106 = vmatprep.subr.mxu0 0.0
    %1107 = vmatpush1.msra.mxu0 0.0
    %1108 = vmatprep.mubr.f32.mxu0 0.0
    %1109 = vmatmul.mubr.f32.gmra.mrb[0].mxu0 %v945
    %v1110 = vpop.f32.mrb[0].mxu0
    %v1111 = vadd.f32 0.0, %v1110
    %v1112 = vpop.f32.mrb[0].mxu0
    %v1113 = vadd.f32 0.0, %v1112
    %1114 = vdwg.mxu0
    %v1115 = vadd.f32 %v969, %v1040
    %v1116 = vadd.f32 %v970, %v1042
    %v1117 = vadd.f32 %v971, %v1111
    %v1118 = vadd.f32 %v972, %v1113
    %v1119 = vmul.f32 %v1115, 0.5
    %v1120 = vtanh.pop %v1119
    %v1121 = vadd.f32 %v1120, 1.0
    %v1122 = vmul.f32 %v1121, 0.5
    %v1123 = vmul.f32 %v1116, 0.5
    %v1124 = vtanh.pop %v1123
    %v1125 = vadd.f32 %v1124, 1.0
    %v1126 = vmul.f32 %v1125, 0.5
    %v1127 = vtanh.pop %v1117
    %v1128 = vmul.f32 %v1118, 0.5
    %v1129 = vtanh.pop %v1128
    %v1130 = vadd.f32 %v1129, 1.0
    %v1131 = vmul.f32 %v1130, 0.5
    %v1132 = vmul.f32 %v1126, %v943
    %v1133 = vmul.f32 %v1122, %v1127
    %v1134 = vadd.f32 %v1132, %v1133
    %v1135 = vtanh.pop %v1134
    %v1136 = vmul.f32 %v1131, %v1135
    %s1137 = scalar_lea.vmem %s0, 40
    %v1138 = vld [vmem:[%s1137] sm:$0xff]
    %1140 = vset.pattern.permute.xlu0 0
    %1141 = vperm.xlu0 %1140, %v1138
    %v1142 = vpop.permute.xlu0 %1141
    %v1144 = vmul.f32 %v1142, %v128
    %v1145 = vmul.f32 %v1142, %v132
    %v1146 = vmul.f32 %v1142, %v136
    %v1147 = vmul.f32 %v1142, %v140
    %v1148 = vadd.f32 %v153, %v1144
    %v1149 = vadd.f32 %v157, %v1145
    %v1150 = vadd.f32 %v161, %v1146
    %v1151 = vadd.f32 %v165, %v1147
    %1152 = vset.pattern.permute.xlu0 1
    %1153 = vperm.xlu0 %1152, %v1138
    %v1154 = vpop.permute.xlu0 %1153
    %v1156 = vmul.f32 %v1154, %v184
    %v1157 = vmul.f32 %v1154, %v188
    %v1158 = vmul.f32 %v1154, %v192
    %v1159 = vmul.f32 %v1154, %v196
    %v1160 = vadd.f32 %v1148, %v1156
    %v1161 = vadd.f32 %v1149, %v1157
    %v1162 = vadd.f32 %v1150, %v1158
    %v1163 = vadd.f32 %v1151, %v1159
    %1164 = vmatprep.subr.mxu0 %v53
    %1165 = vmatpush1.msra.mxu0 %v52
    %1166 = vmatprep.subr.mxu0 %v57
    %1167 = vmatpush1.msra.mxu0 %v56
    %1168 = vmatprep.subr.mxu0 %v61
    %1169 = vmatpush1.msra.mxu0 %v60
    %1170 = vmatprep.subr.mxu0 %v65
    %1171 = vmatpush1.msra.mxu0 %v64
    %1172 = vmatprep.subr.mxu0 %v69
    %1173 = vmatpush1.msra.mxu0 %v68
    %1174 = vmatprep.subr.mxu0 %v73
    %1175 = vmatpush1.msra.mxu0 %v72
    %1176 = vmatprep.subr.mxu0 %v77
    %1177 = vmatpush1.msra.mxu0 %v76
    %1178 = vmatprep.subr.mxu0 %v81
    %1179 = vmatpush1.msra.mxu0 %v80
    %1180 = vmatprep.subr.mxu0 %v85
    %1181 = vmatpush1.msra.mxu0 %v84
    %1182 = vmatprep.subr.mxu0 %v89
    %1183 = vmatpush1.msra.mxu0 %v88
    %1184 = vmatprep.subr.mxu0 %v93
    %1185 = vmatpush1.msra.mxu0 %v92
    %1186 = vmatprep.subr.mxu0 %v97
    %1187 = vmatpush1.msra.mxu0 %v96
    %1188 = vmatprep.subr.mxu0 %v101
    %1189 = vmatpush1.msra.mxu0 %v100
    %1190 = vmatprep.subr.mxu0 %v105
    %1191 = vmatpush1.msra.mxu0 %v104
    %1192 = vmatprep.subr.mxu0 %v109
    %1193 = vmatpush1.msra.mxu0 %v108
    %1194 = vmatprep.subr.mxu0 %v113
    %1195 = vmatpush1.msra.mxu0 %v112
    %1196 = vmatprep.subr.mxu0 0.0
    %1197 = vmatpush1.msra.mxu0 0.0
    %1198 = vmatprep.subr.mxu0 0.0
    %1199 = vmatpush1.msra.mxu0 0.0
    %1200 = vmatprep.subr.mxu0 0.0
    %1201 = vmatpush1.msra.mxu0 0.0
    %1202 = vmatprep.subr.mxu0 0.0
    %1203 = vmatpush1.msra.mxu0 0.0
    %1204 = vmatprep.subr.mxu0 0.0
    %1205 = vmatpush1.msra.mxu0 0.0
    %1206 = vmatprep.subr.mxu0 0.0
    %1207 = vmatpush1.msra.mxu0 0.0
    %1208 = vmatprep.subr.mxu0 0.0
    %1209 = vmatpush1.msra.mxu0 0.0
    %1210 = vmatprep.subr.mxu0 0.0
    %1211 = vmatpush1.msra.mxu0 0.0
    %1212 = vmatprep.subr.mxu0 0.0
    %1213 = vmatpush1.msra.mxu0 0.0
    %1214 = vmatprep.subr.mxu0 0.0
    %1215 = vmatpush1.msra.mxu0 0.0
    %1216 = vmatprep.subr.mxu0 0.0
    %1217 = vmatpush1.msra.mxu0 0.0
    %1218 = vmatprep.subr.mxu0 0.0
    %1219 = vmatpush1.msra.mxu0 0.0
    %1220 = vmatprep.subr.mxu0 0.0
    %1221 = vmatpush1.msra.mxu0 0.0
    %1222 = vmatprep.subr.mxu0 0.0
    %1223 = vmatpush1.msra.mxu0 0.0
    %1224 = vmatprep.subr.mxu0 0.0
    %1225 = vmatpush1.msra.mxu0 0.0
    %1226 = vmatprep.subr.mxu0 0.0
    %1227 = vmatpush1.msra.mxu0 0.0
    %1228 = vmatprep.mubr.f32.mxu0 0.0
    %1229 = vmatmul.mubr.f32.gmra.mrb[0].mxu0 %v1136
    %v1230 = vpop.f32.mrb[0].mxu0
    %v1231 = vadd.f32 0.0, %v1230
    %v1232 = vpop.f32.mrb[0].mxu0
    %v1233 = vadd.f32 0.0, %v1232
    %1234 = vdwg.mxu0
    %1235 = vmatprep.subr.mxu0 %v55
    %1236 = vmatpush1.msra.mxu0 %v54
    %1237 = vmatprep.subr.mxu0 %v59
    %1238 = vmatpush1.msra.mxu0 %v58
    %1239 = vmatprep.subr.mxu0 %v63
    %1240 = vmatpush1.msra.mxu0 %v62
    %1241 = vmatprep.subr.mxu0 %v67
    %1242 = vmatpush1.msra.mxu0 %v66
    %1243 = vmatprep.subr.mxu0 %v71
    %1244 = vmatpush1.msra.mxu0 %v70
    %1245 = vmatprep.subr.mxu0 %v75
    %1246 = vmatpush1.msra.mxu0 %v74
    %1247 = vmatprep.subr.mxu0 %v79
    %1248 = vmatpush1.msra.mxu0 %v78
    %1249 = vmatprep.subr.mxu0 %v83
    %1250 = vmatpush1.msra.mxu0 %v82
    %1251 = vmatprep.subr.mxu0 %v87
    %1252 = vmatpush1.msra.mxu0 %v86
    %1253 = vmatprep.subr.mxu0 %v91
    %1254 = vmatpush1.msra.mxu0 %v90
    %1255 = vmatprep.subr.mxu0 %v95
    %1256 = vmatpush1.msra.mxu0 %v94
    %1257 = vmatprep.subr.mxu0 %v99
    %1258 = vmatpush1.msra.mxu0 %v98
    %1259 = vmatprep.subr.mxu0 %v103
    %1260 = vmatpush1.msra.mxu0 %v102
    %1261 = vmatprep.subr.mxu0 %v107
    %1262 = vmatpush1.msra.mxu0 %v106
    %1263 = vmatprep.subr.mxu0 %v111
    %1264 = vmatpush1.msra.mxu0 %v110
    %1265 = vmatprep.subr.mxu0 %v115
    %1266 = vmatpush1.msra.mxu0 %v114
    %1267 = vmatprep.subr.mxu0 0.0
    %1268 = vmatpush1.msra.mxu0 0.0
    %1269 = vmatprep.subr.mxu0 0.0
    %1270 = vmatpush1.msra.mxu0 0.0
    %1271 = vmatprep.subr.mxu0 0.0
    %1272 = vmatpush1.msra.mxu0 0.0
    %1273 = vmatprep.subr.mxu0 0.0
    %1274 = vmatpush1.msra.mxu0 0.0
    %1275 = vmatprep.subr.mxu0 0.0
    %1276 = vmatpush1.msra.mxu0 0.0
    %1277 = vmatprep.subr.mxu0 0.0
    %1278 = vmatpush1.msra.mxu0 0.0
    %1279 = vmatprep.subr.mxu0 0.0
    %1280 = vmatpush1.msra.mxu0 0.0
    %1281 = vmatprep.subr.mxu0 0.0
    %1282 = vmatpush1.msra.mxu0 0.0
    %1283 = vmatprep.subr.mxu0 0.0
    %1284 = vmatpush1.msra.mxu0 0.0
    %1285 = vmatprep.subr.mxu0 0.0
    %1286 = vmatpush1.msra.mxu0 0.0
    %1287 = vmatprep.subr.mxu0 0.0
    %1288 = vmatpush1.msra.mxu0 0.0
    %1289 = vmatprep.subr.mxu0 0.0
    %1290 = vmatpush1.msra.mxu0 0.0
    %1291 = vmatprep.subr.mxu0 0.0
    %1292 = vmatpush1.msra.mxu0 0.0
    %1293 = vmatprep.subr.mxu0 0.0
    %1294 = vmatpush1.msra.mxu0 0.0
    %1295 = vmatprep.subr.mxu0 0.0
    %1296 = vmatpush1.msra.mxu0 0.0
    %1297 = vmatprep.subr.mxu0 0.0
    %1298 = vmatpush1.msra.mxu0 0.0
    %1299 = vmatprep.mubr.f32.mxu0 0.0
    %1300 = vmatmul.mubr.f32.gmra.mrb[0].mxu0 %v1136
    %v1301 = vpop.f32.mrb[0].mxu0
    %v1302 = vadd.f32 0.0, %v1301
    %v1303 = vpop.f32.mrb[0].mxu0
    %v1304 = vadd.f32 0.0, %v1303
    %1305 = vdwg.mxu0
    %v1306 = vadd.f32 %v1160, %v1231
    %v1307 = vadd.f32 %v1161, %v1233
    %v1308 = vadd.f32 %v1162, %v1302
    %v1309 = vadd.f32 %v1163, %v1304
    %v1310 = vmul.f32 %v1306, 0.5
    %v1311 = vtanh.pop %v1310
    %v1312 = vadd.f32 %v1311, 1.0
    %v1313 = vmul.f32 %v1312, 0.5
    %v1314 = vmul.f32 %v1307, 0.5
    %v1315 = vtanh.pop %v1314
    %v1316 = vadd.f32 %v1315, 1.0
    %v1317 = vmul.f32 %v1316, 0.5
    %v1318 = vtanh.pop %v1308
    %v1319 = vmul.f32 %v1309, 0.5
    %v1320 = vtanh.pop %v1319
    %v1321 = vadd.f32 %v1320, 1.0
    %v1322 = vmul.f32 %v1321, 0.5
    %v1323 = vmul.f32 %v1317, %v1134
    %v1324 = vmul.f32 %v1313, %v1318
    %v1325 = vadd.f32 %v1323, %v1324
    %v1326 = vtanh.pop %v1325
    %v1327 = vmul.f32 %v1322, %v1326
    %s1328 = scalar_lea.vmem %s0, 48
    %v1329 = vld [vmem:[%s1328] sm:$0xff]
    %1331 = vset.pattern.permute.xlu0 0
    %1332 = vperm.xlu0 %1331, %v1329
    %v1333 = vpop.permute.xlu0 %1332
    %v1335 = vmul.f32 %v1333, %v128
    %v1336 = vmul.f32 %v1333, %v132
    %v1337 = vmul.f32 %v1333, %v136
    %v1338 = vmul.f32 %v1333, %v140
    %v1339 = vadd.f32 %v153, %v1335
    %v1340 = vadd.f32 %v157, %v1336
    %v1341 = vadd.f32 %v161, %v1337
    %v1342 = vadd.f32 %v165, %v1338
    %1343 = vset.pattern.permute.xlu0 1
    %1344 = vperm.xlu0 %1343, %v1329
    %v1345 = vpop.permute.xlu0 %1344
    %v1347 = vmul.f32 %v1345, %v184
    %v1348 = vmul.f32 %v1345, %v188
    %v1349 = vmul.f32 %v1345, %v192
    %v1350 = vmul.f32 %v1345, %v196
    %v1351 = vadd.f32 %v1339, %v1347
    %v1352 = vadd.f32 %v1340, %v1348
    %v1353 = vadd.f32 %v1341, %v1349
    %v1354 = vadd.f32 %v1342, %v1350
    %1355 = vmatprep.subr.mxu0 %v53
    %1356 = vmatpush1.msra.mxu0 %v52
    %1357 = vmatprep.subr.mxu0 %v57
    %1358 = vmatpush1.msra.mxu0 %v56
    %1359 = vmatprep.subr.mxu0 %v61
    %1360 = vmatpush1.msra.mxu0 %v60
    %1361 = vmatprep.subr.mxu0 %v65
    %1362 = vmatpush1.msra.mxu0 %v64
    %1363 = vmatprep.subr.mxu0 %v69
    %1364 = vmatpush1.msra.mxu0 %v68
    %1365 = vmatprep.subr.mxu0 %v73
    %1366 = vmatpush1.msra.mxu0 %v72
    %1367 = vmatprep.subr.mxu0 %v77
    %1368 = vmatpush1.msra.mxu0 %v76
    %1369 = vmatprep.subr.mxu0 %v81
    %1370 = vmatpush1.msra.mxu0 %v80
    %1371 = vmatprep.subr.mxu0 %v85
    %1372 = vmatpush1.msra.mxu0 %v84
    %1373 = vmatprep.subr.mxu0 %v89
    %1374 = vmatpush1.msra.mxu0 %v88
    %1375 = vmatprep.subr.mxu0 %v93
    %1376 = vmatpush1.msra.mxu0 %v92
    %1377 = vmatprep.subr.mxu0 %v97
    %1378 = vmatpush1.msra.mxu0 %v96
    %1379 = vmatprep.subr.mxu0 %v101
    %1380 = vmatpush1.msra.mxu0 %v100
    %1381 = vmatprep.subr.mxu0 %v105
    %1382 = vmatpush1.msra.mxu0 %v104
    %1383 = vmatprep.subr.mxu0 %v109
    %1384 = vmatpush1.msra.mxu0 %v108
    %1385 = vmatprep.subr.mxu0 %v113
    %1386 = vmatpush1.msra.mxu0 %v112
    %1387 = vmatprep.subr.mxu0 0.0
    %1388 = vmatpush1.msra.mxu0 0.0
    %1389 = vmatprep.subr.mxu0 0.0
    %1390 = vmatpush1.msra.mxu0 0.0
    %1391 = vmatprep.subr.mxu0 0.0
    %1392 = vmatpush1.msra.mxu0 0.0
    %1393 = vmatprep.subr.mxu0 0.0
    %1394 = vmatpush1.msra.mxu0 0.0
    %1395 = vmatprep.subr.mxu0 0.0
    %1396 = vmatpush1.msra.mxu0 0.0
    %1397 = vmatprep.subr.mxu0 0.0
    %1398 = vmatpush1.msra.mxu0 0.0
    %1399 = vmatprep.subr.mxu0 0.0
    %1400 = vmatpush1.msra.mxu0 0.0
    %1401 = vmatprep.subr.mxu0 0.0
    %1402 = vmatpush1.msra.mxu0 0.0
    %1403 = vmatprep.subr.mxu0 0.0
    %1404 = vmatpush1.msra.mxu0 0.0
    %1405 = vmatprep.subr.mxu0 0.0
    %1406 = vmatpush1.msra.mxu0 0.0
    %1407 = vmatprep.subr.mxu0 0.0
    %1408 = vmatpush1.msra.mxu0 0.0
    %1409 = vmatprep.subr.mxu0 0.0
    %1410 = vmatpush1.msra.mxu0 0.0
    %1411 = vmatprep.subr.mxu0 0.0
    %1412 = vmatpush1.msra.mxu0 0.0
    %1413 = vmatprep.subr.mxu0 0.0
    %1414 = vmatpush1.msra.mxu0 0.0
    %1415 = vmatprep.subr.mxu0 0.0
    %1416 = vmatpush1.msra.mxu0 0.0
    %1417 = vmatprep.subr.mxu0 0.0
    %1418 = vmatpush1.msra.mxu0 0.0
    %1419 = vmatprep.mubr.f32.mxu0 0.0
    %1420 = vmatmul.mubr.f32.gmra.mrb[0].mxu0 %v1327
    %v1421 = vpop.f32.mrb[0].mxu0
    %v1422 = vadd.f32 0.0, %v1421
    %v1423 = vpop.f32.mrb[0].mxu0
    %v1424 = vadd.f32 0.0, %v1423
    %1425 = vdwg.mxu0
    %1426 = vmatprep.subr.mxu0 %v55
    %1427 = vmatpush1.msra.mxu0 %v54
    %1428 = vmatprep.subr.mxu0 %v59
    %1429 = vmatpush1.msra.mxu0 %v58
    %1430 = vmatprep.subr.mxu0 %v63
    %1431 = vmatpush1.msra.mxu0 %v62
    %1432 = vmatprep.subr.mxu0 %v67
    %1433 = vmatpush1.msra.mxu0 %v66
    %1434 = vmatprep.subr.mxu0 %v71
    %1435 = vmatpush1.msra.mxu0 %v70
    %1436 = vmatprep.subr.mxu0 %v75
    %1437 = vmatpush1.msra.mxu0 %v74
    %1438 = vmatprep.subr.mxu0 %v79
    %1439 = vmatpush1.msra.mxu0 %v78
    %1440 = vmatprep.subr.mxu0 %v83
    %1441 = vmatpush1.msra.mxu0 %v82
    %1442 = vmatprep.subr.mxu0 %v87
    %1443 = vmatpush1.msra.mxu0 %v86
    %1444 = vmatprep.subr.mxu0 %v91
    %1445 = vmatpush1.msra.mxu0 %v90
    %1446 = vmatprep.subr.mxu0 %v95
    %1447 = vmatpush1.msra.mxu0 %v94
    %1448 = vmatprep.subr.mxu0 %v99
    %1449 = vmatpush1.msra.mxu0 %v98
    %1450 = vmatprep.subr.mxu0 %v103
    %1451 = vmatpush1.msra.mxu0 %v102
    %1452 = vmatprep.subr.mxu0 %v107
    %1453 = vmatpush1.msra.mxu0 %v106
    %1454 = vmatprep.subr.mxu0 %v111
    %1455 = vmatpush1.msra.mxu0 %v110
    %1456 = vmatprep.subr.mxu0 %v115
    %1457 = vmatpush1.msra.mxu0 %v114
    %1458 = vmatprep.subr.mxu0 0.0
    %1459 = vmatpush1.msra.mxu0 0.0
    %1460 = vmatprep.subr.mxu0 0.0
    %1461 = vmatpush1.msra.mxu0 0.0
    %1462 = vmatprep.subr.mxu0 0.0
    %1463 = vmatpush1.msra.mxu0 0.0
    %1464 = vmatprep.subr.mxu0 0.0
    %1465 = vmatpush1.msra.mxu0 0.0
    %1466 = vmatprep.subr.mxu0 0.0
    %1467 = vmatpush1.msra.mxu0 0.0
    %1468 = vmatprep.subr.mxu0 0.0
    %1469 = vmatpush1.msra.mxu0 0.0
    %1470 = vmatprep.subr.mxu0 0.0
    %1471 = vmatpush1.msra.mxu0 0.0
    %1472 = vmatprep.subr.mxu0 0.0
    %1473 = vmatpush1.msra.mxu0 0.0
    %1474 = vmatprep.subr.mxu0 0.0
    %1475 = vmatpush1.msra.mxu0 0.0
    %1476 = vmatprep.subr.mxu0 0.0
    %1477 = vmatpush1.msra.mxu0 0.0
    %1478 = vmatprep.subr.mxu0 0.0
    %1479 = vmatpush1.msra.mxu0 0.0
    %1480 = vmatprep.subr.mxu0 0.0
    %1481 = vmatpush1.msra.mxu0 0.0
    %1482 = vmatprep.subr.mxu0 0.0
    %1483 = vmatpush1.msra.mxu0 0.0
    %1484 = vmatprep.subr.mxu0 0.0
    %1485 = vmatpush1.msra.mxu0 0.0
    %1486 = vmatprep.subr.mxu0 0.0
    %1487 = vmatpush1.msra.mxu0 0.0
    %1488 = vmatprep.subr.mxu0 0.0
    %1489 = vmatpush1.msra.mxu0 0.0
    %1490 = vmatprep.mubr.f32.mxu0 0.0
    %1491 = vmatmul.mubr.f32.gmra.mrb[0].mxu0 %v1327
    %v1492 = vpop.f32.mrb[0].mxu0
    %v1493 = vadd.f32 0.0, %v1492
    %v1494 = vpop.f32.mrb[0].mxu0
    %v1495 = vadd.f32 0.0, %v1494
    %1496 = vdwg.mxu0
    %v1497 = vadd.f32 %v1351, %v1422
    %v1498 = vadd.f32 %v1352, %v1424
    %v1499 = vadd.f32 %v1353, %v1493
    %v1500 = vadd.f32 %v1354, %v1495
    %v1501 = vmul.f32 %v1497, 0.5
    %v1502 = vtanh.pop %v1501
    %v1503 = vadd.f32 %v1502, 1.0
    %v1504 = vmul.f32 %v1503, 0.5
    %v1505 = vmul.f32 %v1498, 0.5
    %v1506 = vtanh.pop %v1505
    %v1507 = vadd.f32 %v1506, 1.0
    %v1508 = vmul.f32 %v1507, 0.5
    %v1509 = vtanh.pop %v1499
    %v1510 = vmul.f32 %v1500, 0.5
    %v1511 = vtanh.pop %v1510
    %v1512 = vadd.f32 %v1511, 1.0
    %v1513 = vmul.f32 %v1512, 0.5
    %v1514 = vmul.f32 %v1508, %v1325
    %v1515 = vmul.f32 %v1504, %v1509
    %v1516 = vadd.f32 %v1514, %v1515
    %v1517 = vtanh.pop %v1516
    %v1518 = vmul.f32 %v1513, %v1517
    %s1519 = scalar_lea.vmem %s0, 56
    %v1520 = vld [vmem:[%s1519] sm:$0xff]
    %1522 = vset.pattern.permute.xlu0 0
    %1523 = vperm.xlu0 %1522, %v1520
    %v1524 = vpop.permute.xlu0 %1523
    %v1526 = vmul.f32 %v1524, %v128
    %v1527 = vmul.f32 %v1524, %v132
    %v1528 = vmul.f32 %v1524, %v136
    %v1529 = vmul.f32 %v1524, %v140
    %v1530 = vadd.f32 %v153, %v1526
    %v1531 = vadd.f32 %v157, %v1527
    %v1532 = vadd.f32 %v161, %v1528
    %v1533 = vadd.f32 %v165, %v1529
    %1534 = vset.pattern.permute.xlu0 1
    %1535 = vperm.xlu0 %1534, %v1520
    %v1536 = vpop.permute.xlu0 %1535
    %v1538 = vmul.f32 %v1536, %v184
    %v1539 = vmul.f32 %v1536, %v188
    %v1540 = vmul.f32 %v1536, %v192
    %v1541 = vmul.f32 %v1536, %v196
    %v1542 = vadd.f32 %v1530, %v1538
    %v1543 = vadd.f32 %v1531, %v1539
    %v1544 = vadd.f32 %v1532, %v1540
    %v1545 = vadd.f32 %v1533, %v1541
    %1546 = vmatprep.subr.mxu0 %v53
    %1547 = vmatpush1.msra.mxu0 %v52
    %1548 = vmatprep.subr.mxu0 %v57
    %1549 = vmatpush1.msra.mxu0 %v56
    %1550 = vmatprep.subr.mxu0 %v61
    %1551 = vmatpush1.msra.mxu0 %v60
    %1552 = vmatprep.subr.mxu0 %v65
    %1553 = vmatpush1.msra.mxu0 %v64
    %1554 = vmatprep.subr.mxu0 %v69
    %1555 = vmatpush1.msra.mxu0 %v68
    %1556 = vmatprep.subr.mxu0 %v73
    %1557 = vmatpush1.msra.mxu0 %v72
    %1558 = vmatprep.subr.mxu0 %v77
    %1559 = vmatpush1.msra.mxu0 %v76
    %1560 = vmatprep.subr.mxu0 %v81
    %1561 = vmatpush1.msra.mxu0 %v80
    %1562 = vmatprep.subr.mxu0 %v85
    %1563 = vmatpush1.msra.mxu0 %v84
    %1564 = vmatprep.subr.mxu0 %v89
    %1565 = vmatpush1.msra.mxu0 %v88
    %1566 = vmatprep.subr.mxu0 %v93
    %1567 = vmatpush1.msra.mxu0 %v92
    %1568 = vmatprep.subr.mxu0 %v97
    %1569 = vmatpush1.msra.mxu0 %v96
    %1570 = vmatprep.subr.mxu0 %v101
    %1571 = vmatpush1.msra.mxu0 %v100
    %1572 = vmatprep.subr.mxu0 %v105
    %1573 = vmatpush1.msra.mxu0 %v104
    %1574 = vmatprep.subr.mxu0 %v109
    %1575 = vmatpush1.msra.mxu0 %v108
    %1576 = vmatprep.subr.mxu0 %v113
    %1577 = vmatpush1.msra.mxu0 %v112
    %1578 = vmatprep.subr.mxu0 0.0
    %1579 = vmatpush1.msra.mxu0 0.0
    %1580 = vmatprep.subr.mxu0 0.0
    %1581 = vmatpush1.msra.mxu0 0.0
    %1582 = vmatprep.subr.mxu0 0.0
    %1583 = vmatpush1.msra.mxu0 0.0
    %1584 = vmatprep.subr.mxu0 0.0
    %1585 = vmatpush1.msra.mxu0 0.0
    %1586 = vmatprep.subr.mxu0 0.0
    %1587 = vmatpush1.msra.mxu0 0.0
    %1588 = vmatprep.subr.mxu0 0.0
    %1589 = vmatpush1.msra.mxu0 0.0
    %1590 = vmatprep.subr.mxu0 0.0
    %1591 = vmatpush1.msra.mxu0 0.0
    %1592 = vmatprep.subr.mxu0 0.0
    %1593 = vmatpush1.msra.mxu0 0.0
    %1594 = vmatprep.subr.mxu0 0.0
    %1595 = vmatpush1.msra.mxu0 0.0
    %1596 = vmatprep.subr.mxu0 0.0
    %1597 = vmatpush1.msra.mxu0 0.0
    %1598 = vmatprep.subr.mxu0 0.0
    %1599 = vmatpush1.msra.mxu0 0.0
    %1600 = vmatprep.subr.mxu0 0.0
    %1601 = vmatpush1.msra.mxu0 0.0
    %1602 = vmatprep.subr.mxu0 0.0
    %1603 = vmatpush1.msra.mxu0 0.0
    %1604 = vmatprep.subr.mxu0 0.0
    %1605 = vmatpush1.msra.mxu0 0.0
    %1606 = vmatprep.subr.mxu0 0.0
    %1607 = vmatpush1.msra.mxu0 0.0
    %1608 = vmatprep.subr.mxu0 0.0
    %1609 = vmatpush1.msra.mxu0 0.0
    %1610 = vmatprep.mubr.f32.mxu0 0.0
    %1611 = vmatmul.mubr.f32.gmra.mrb[0].mxu0 %v1518
    %v1612 = vpop.f32.mrb[0].mxu0
    %v1613 = vadd.f32 0.0, %v1612
    %v1614 = vpop.f32.mrb[0].mxu0
    %v1615 = vadd.f32 0.0, %v1614
    %1616 = vdwg.mxu0
    %1617 = vmatprep.subr.mxu0 %v55
    %1618 = vmatpush1.msra.mxu0 %v54
    %1619 = vmatprep.subr.mxu0 %v59
    %1620 = vmatpush1.msra.mxu0 %v58
    %1621 = vmatprep.subr.mxu0 %v63
    %1622 = vmatpush1.msra.mxu0 %v62
    %1623 = vmatprep.subr.mxu0 %v67
    %1624 = vmatpush1.msra.mxu0 %v66
    %1625 = vmatprep.subr.mxu0 %v71
    %1626 = vmatpush1.msra.mxu0 %v70
    %1627 = vmatprep.subr.mxu0 %v75
    %1628 = vmatpush1.msra.mxu0 %v74
    %1629 = vmatprep.subr.mxu0 %v79
    %1630 = vmatpush1.msra.mxu0 %v78
    %1631 = vmatprep.subr.mxu0 %v83
    %1632 = vmatpush1.msra.mxu0 %v82
    %1633 = vmatprep.subr.mxu0 %v87
    %1634 = vmatpush1.msra.mxu0 %v86
    %1635 = vmatprep.subr.mxu0 %v91
    %1636 = vmatpush1.msra.mxu0 %v90
    %1637 = vmatprep.subr.mxu0 %v95
    %1638 = vmatpush1.msra.mxu0 %v94
    %1639 = vmatprep.subr.mxu0 %v99
    %1640 = vmatpush1.msra.mxu0 %v98
    %1641 = vmatprep.subr.mxu0 %v103
    %1642 = vmatpush1.msra.mxu0 %v102
    %1643 = vmatprep.subr.mxu0 %v107
    %1644 = vmatpush1.msra.mxu0 %v106
    %1645 = vmatprep.subr.mxu0 %v111
    %1646 = vmatpush1.msra.mxu0 %v110
    %1647 = vmatprep.subr.mxu0 %v115
    %1648 = vmatpush1.msra.mxu0 %v114
    %1649 = vmatprep.subr.mxu0 0.0
    %1650 = vmatpush1.msra.mxu0 0.0
    %1651 = vmatprep.subr.mxu0 0.0
    %1652 = vmatpush1.msra.mxu0 0.0
    %1653 = vmatprep.subr.mxu0 0.0
    %1654 = vmatpush1.msra.mxu0 0.0
    %1655 = vmatprep.subr.mxu0 0.0
    %1656 = vmatpush1.msra.mxu0 0.0
    %1657 = vmatprep.subr.mxu0 0.0
    %1658 = vmatpush1.msra.mxu0 0.0
    %1659 = vmatprep.subr.mxu0 0.0
    %1660 = vmatpush1.msra.mxu0 0.0
    %1661 = vmatprep.subr.mxu0 0.0
    %1662 = vmatpush1.msra.mxu0 0.0
    %1663 = vmatprep.subr.mxu0 0.0
    %1664 = vmatpush1.msra.mxu0 0.0
    %1665 = vmatprep.subr.mxu0 0.0
    %1666 = vmatpush1.msra.mxu0 0.0
    %1667 = vmatprep.subr.mxu0 0.0
    %1668 = vmatpush1.msra.mxu0 0.0
    %1669 = vmatprep.subr.mxu0 0.0
    %1670 = vmatpush1.msra.mxu0 0.0
    %1671 = vmatprep.subr.mxu0 0.0
    %1672 = vmatpush1.msra.mxu0 0.0
    %1673 = vmatprep.subr.mxu0 0.0
    %1674 = vmatpush1.msra.mxu0 0.0
    %1675 = vmatprep.subr.mxu0 0.0
    %1676 = vmatpush1.msra.mxu0 0.0
    %1677 = vmatprep.subr.mxu0 0.0
    %1678 = vmatpush1.msra.mxu0 0.0
    %1679 = vmatprep.subr.mxu0 0.0
    %1680 = vmatpush1.msra.mxu0 0.0
    %1681 = vmatprep.mubr.f32.mxu0 0.0
    %1682 = vmatmul.mubr.f32.gmra.mrb[0].mxu0 %v1518
    %v1683 = vpop.f32.mrb[0].mxu0
    %v1684 = vadd.f32 0.0, %v1683
    %v1685 = vpop.f32.mrb[0].mxu0
    %v1686 = vadd.f32 0.0, %v1685
    %1687 = vdwg.mxu0
    %v1688 = vadd.f32 %v1542, %v1613
    %v1689 = vadd.f32 %v1543, %v1615
    %v1690 = vadd.f32 %v1544, %v1684
    %v1691 = vadd.f32 %v1545, %v1686
    %v1692 = vmul.f32 %v1688, 0.5
    %v1693 = vtanh.pop %v1692
    %v1694 = vadd.f32 %v1693, 1.0
    %v1695 = vmul.f32 %v1694, 0.5
    %v1696 = vmul.f32 %v1689, 0.5
    %v1697 = vtanh.pop %v1696
    %v1698 = vadd.f32 %v1697, 1.0
    %v1699 = vmul.f32 %v1698, 0.5
    %v1700 = vtanh.pop %v1690
    %v1701 = vmul.f32 %v1691, 0.5
    %v1702 = vtanh.pop %v1701
    %v1703 = vadd.f32 %v1702, 1.0
    %v1704 = vmul.f32 %v1703, 0.5
    %v1705 = vmul.f32 %v1699, %v1516
    %v1706 = vmul.f32 %v1695, %v1700
    %v1707 = vadd.f32 %v1705, %v1706
    %v1708 = vtanh.pop %v1707
    %v1709 = vmul.f32 %v1704, %v1708
    %v1710 = vld [vmem:[#allocation5] sm:$0xff]
    %v1711 = vld [vmem:[#allocation5 + $0x8] sm:$0xff]
    %v1712 = vld [vmem:[#allocation5 + $0x10] sm:$0xff]
    %v1713 = vld [vmem:[#allocation5 + $0x18] sm:$0xff]
    %v1714 = vld [vmem:[#allocation5 + $0x20] sm:$0xff]
    %v1715 = vld [vmem:[#allocation5 + $0x28] sm:$0xff]
    %v1716 = vld [vmem:[#allocation5 + $0x30] sm:$0xff]
    %v1717 = vld [vmem:[#allocation5 + $0x38] sm:$0xff]
    %v1718 = vld [vmem:[#allocation5 + $0x40] sm:$0xff]
    %v1719 = vld [vmem:[#allocation5 + $0x48] sm:$0xff]
    %v1720 = vld [vmem:[#allocation5 + $0x50] sm:$0xff]
    %v1721 = vld [vmem:[#allocation5 + $0x58] sm:$0xff]
    %v1722 = vld [vmem:[#allocation5 + $0x60] sm:$0xff]
    %v1723 = vld [vmem:[#allocation5 + $0x68] sm:$0xff]
    %v1724 = vld [vmem:[#allocation5 + $0x70] sm:$0xff]
    %v1725 = vld [vmem:[#allocation5 + $0x78] sm:$0xff]
    %v1726 = vld [vmem:[%s5] sm:$0x1]
    %v1728 = vlaneseq
    %v1729 = vshrl.u32 %v1728, 7
    %v1730 = vsub.s32 0, %v1729
    %v1731 = vrot.slane %v1726, %v1730
    %1733 = vmatprep.subr.mxu0 0.0
    %1734 = vmatpush1.msra.mxu0 %v1710
    %1735 = vmatprep.subr.mxu0 0.0
    %1736 = vmatpush1.msra.mxu0 %v1711
    %1737 = vmatprep.subr.mxu0 0.0
    %1738 = vmatpush1.msra.mxu0 %v1712
    %1739 = vmatprep.subr.mxu0 0.0
    %1740 = vmatpush1.msra.mxu0 %v1713
    %1741 = vmatprep.subr.mxu0 0.0
    %1742 = vmatpush1.msra.mxu0 %v1714
    %1743 = vmatprep.subr.mxu0 0.0
    %1744 = vmatpush1.msra.mxu0 %v1715
    %1745 = vmatprep.subr.mxu0 0.0
    %1746 = vmatpush1.msra.mxu0 %v1716
    %1747 = vmatprep.subr.mxu0 0.0
    %1748 = vmatpush1.msra.mxu0 %v1717
    %1749 = vmatprep.subr.mxu0 0.0
    %1750 = vmatpush1.msra.mxu0 %v1718
    %1751 = vmatprep.subr.mxu0 0.0
    %1752 = vmatpush1.msra.mxu0 %v1719
    %1753 = vmatprep.subr.mxu0 0.0
    %1754 = vmatpush1.msra.mxu0 %v1720
    %1755 = vmatprep.subr.mxu0 0.0
    %1756 = vmatpush1.msra.mxu0 %v1721
    %1757 = vmatprep.subr.mxu0 0.0
    %1758 = vmatpush1.msra.mxu0 %v1722
    %1759 = vmatprep.subr.mxu0 0.0
    %1760 = vmatpush1.msra.mxu0 %v1723
    %1761 = vmatprep.subr.mxu0 0.0
    %1762 = vmatpush1.msra.mxu0 %v1724
    %1763 = vmatprep.subr.mxu0 0.0
    %1764 = vmatpush1.msra.mxu0 %v1725
    %1765 = vmatprep.subr.mxu0 0.0
    %1766 = vmatpush1.msra.mxu0 0.0
    %1767 = vmatprep.subr.mxu0 0.0
    %1768 = vmatpush1.msra.mxu0 0.0
    %1769 = vmatprep.subr.mxu0 0.0
    %1770 = vmatpush1.msra.mxu0 0.0
    %1771 = vmatprep.subr.mxu0 0.0
    %1772 = vmatpush1.msra.mxu0 0.0
    %1773 = vmatprep.subr.mxu0 0.0
    %1774 = vmatpush1.msra.mxu0 0.0
    %1775 = vmatprep.subr.mxu0 0.0
    %1776 = vmatpush1.msra.mxu0 0.0
    %1777 = vmatprep.subr.mxu0 0.0
    %1778 = vmatpush1.msra.mxu0 0.0
    %1779 = vmatprep.subr.mxu0 0.0
    %1780 = vmatpush1.msra.mxu0 0.0
    %1781 = vmatprep.subr.mxu0 0.0
    %1782 = vmatpush1.msra.mxu0 0.0
    %1783 = vmatprep.subr.mxu0 0.0
    %1784 = vmatpush1.msra.mxu0 0.0
    %1785 = vmatprep.subr.mxu0 0.0
    %1786 = vmatpush1.msra.mxu0 0.0
    %1787 = vmatprep.subr.mxu0 0.0
    %1788 = vmatpush1.msra.mxu0 0.0
    %1789 = vmatprep.subr.mxu0 0.0
    %1790 = vmatpush1.msra.mxu0 0.0
    %1791 = vmatprep.subr.mxu0 0.0
    %1792 = vmatpush1.msra.mxu0 0.0
    %1793 = vmatprep.subr.mxu0 0.0
    %1794 = vmatpush1.msra.mxu0 0.0
    %1795 = vmatprep.subr.mxu0 0.0
    %1796 = vmatpush1.msra.mxu0 0.0
    %1797 = vmatprep.mubr.f32.mxu0 0.0
    %1798 = vmatmul.mubr.f32.gmra.mrb[0].mxu0 %v1709
    %v1799 = vpop.f32.mrb[0].mxu0
    %v1800 = vadd.f32 %v1731, %v1799
    %v1801 = vpop.f32.mrb[0].mxu0
    %1802 = vdwg.mxu0
    %1803 = vst [vmem:[#allocation7] sm:$0xff] %v1800
    // Predicated region
    $region34: #{tpu_custom_call.1} parent=1 // pred_check
      _
    $region35: #{tpu_custom_call.1} parent=1 // pred_check_branch
      %1805 = sbr.rel (0) target = $region37
    $region36: #{tpu_custom_call.1} parent=1 // pred_region
      %s1807 = ssub.s32 128, 128
      %1808 = vsyncadd [#allocation4], %s1807
      %s1810 = sshll.u32 [#allocation7], 4
      %s1811 = int_to_ptr.vmem [resolvable:$true] %s1810
      %1813 = dma.vmem_to_hbm [thread:$0]  %s1811, 128, %s6, [#allocation4]
    $region37: #{tpu_custom_call.1} parent=1 // pred_fallthru
      _
    // Predicated region
    $region38: #{tpu_custom_call.1} parent=1 // pred_check
      _
    $region39: #{tpu_custom_call.1} parent=1 // pred_check_branch
      %1815 = sbr.rel (0) target = $region41
    $region40: #{tpu_custom_call.1} parent=1 // pred_region
      %1816 = dma.done [#allocation4], 128
    $region41: #{tpu_custom_call.1} parent=1 // pred_fallthru
      _
    %1817 = vsyncpa [#allocation3], 1
    %1818 = vsyncpa [#allocation6], 1
    %1819 = vsyncpa [#allocation4], 1

</llo_original>
